<compile_context>
chip_gen: v7x
topology: tpu7x:2x2x1
jax: 0.10.0
libtpu: 0.0.40
codegen_flags: <defaults>
</compile_context>

<pallas_src>
import jax
import jax.numpy as jnp
from jax.experimental import pallas as pl
from jax.experimental.pallas import tpu as pltpu


def _round_up(x, m):
    return ((x + m - 1) // m) * m


def _pick_tile_rows(Ho, Wo_pad, Cin, Cout_pad, itemsize=4):
    """Pick TH = output rows per grid step.

    Target ~1024 matmul rows (TH * Wo_pad) to amortize the ~0.35us/step grid
    overhead, but keep one set of blocks under ~6 MiB so that the
    double-buffered input + output tiles stay below the smallest scoped-VMEM
    default across generations (v5e: 16 MiB scoped default, v7x: 64 MiB
    physical VMEM).
    """
    vmem_budget = 6 * 1024 * 1024
    target_rows = 1024
    th = max(1, min(Ho, max(1, target_rows // max(Wo_pad, 1))))

    def block_bytes(t):
        x_b = 4 * (t + 1) * (Wo_pad + 1) * Cin * itemsize   # parity-plane window
        o_b = t * Wo_pad * Cout_pad * itemsize               # output tile
        return x_b + o_b

    while th > 1 and block_bytes(th) > vmem_budget:
        th = max(1, th // 2)
    return th


def _make_kernel(TH, Wo_pad, Cin, Cout_pad):
    def kernel(x_ref, w_ref, b_ref, o_ref):
        # x_ref: (4, TH+1, Wo_pad+1, Cin)  parity-plane window of the padded input
        # w_ref: (9, Cin, Cout_pad)        resident weights (kh*3 + kw major)
        # b_ref: (1, Cout_pad)             resident bias
        # o_ref: (TH, Wo_pad, Cout_pad)    lane-dense output tile
        acc = jnp.zeros((TH * Wo_pad, Cout_pad), jnp.float32)
        for kh in range(3):                 # unrolled 3x3 taps, unit-stride slices
            for kw in range(3):
                p = (kh % 2) * 2 + (kw % 2)   # parity plane index
                dh, dw = kh // 2, kw // 2     # +0/+1 plane-row / plane-col offset
                x_tap = x_ref[p, dh:dh + TH, dw:dw + Wo_pad, :]
                x_tap = x_tap.reshape(TH * Wo_pad, Cin)
                acc = acc + jnp.dot(x_tap, w_ref[kh * 3 + kw],
                                    preferred_element_type=jnp.float32)
        acc = acc + b_ref[...]
        o_ref[...] = acc.reshape(TH, Wo_pad, Cout_pad).astype(o_ref.dtype)

    return kernel


def downsample_conv(x_nchw, weight, bias, *, compute_dtype=None):
    """Conv2d(in_ch, out_ch, kernel_size=3, stride=2, padding=1) == DownSample.forward.

    x_nchw: (N, Cin, H, W)    -- PyTorch NCHW input
    weight: (Cout, Cin, 3, 3) -- PyTorch conv weight layout
    bias:   (Cout,)
    returns (N, Cout, Ho, Wo)
    """
    N, Cin, H, W = x_nchw.shape
    Cout = weight.shape[0]
    Ho = (H + 2 - 3) // 2 + 1
    Wo = (W + 2 - 3) // 2 + 1

    Cout_pad = _round_up(Cout, 128)   # lane-dense stores / full MXU columns
    Wo_pad = _round_up(Wo, 8)         # sublane-aligned in-kernel reshapes
    TH = _pick_tile_rows(Ho, Wo_pad, Cin, Cout_pad, 4)
    nT = pl.cdiv(Ho, TH)
    Ho_pad = nT * TH

    # ---- wrapper glue: one pass over the activations (no im2col in HBM) ----
    # NCHW -> NHWC (kept only for the PyTorch interface; drop if the
    # surrounding model already runs NHWC).
    x = jnp.transpose(x_nchw, (0, 2, 3, 1))
    # conv zero-padding (1 top/left) + bottom/right padding up to even,
    # tile-divisible extents.
    Hp, Wp = 2 * (Ho_pad + 1), 2 * (Wo_pad + 1)
    x = jnp.pad(x, ((0, 0), (1, Hp - H - 1), (1, Wp - W - 1), (0, 0)))
    # space-to-depth: planes[n, 2*ph+pw, r, c, :] = xpad[n, 2r+ph, 2c+pw, :]
    planes = x.reshape(N, Ho_pad + 1, 2, Wo_pad + 1, 2, Cin)
    planes = jnp.transpose(planes, (0, 2, 4, 1, 3, 5))
    planes = planes.reshape(N, 4, Ho_pad + 1, Wo_pad + 1, Cin)
    # per-row-tile windows (TH+1 plane rows each; only 1 row duplicated per tile)
    x_tiles = jnp.stack(
        [planes[:, :, t * TH:t * TH + TH + 1] for t in range(nT)], axis=1)
    # -> (N, nT, 4, TH+1, Wo_pad+1, Cin)

    # weights: (Cout, Cin, 3, 3) -> (kh, kw, Cin, Cout) -> (9, Cin, Cout_pad)
    w = jnp.transpose(weight, (2, 3, 1, 0)).reshape(9, Cin, Cout)
    w = jnp.pad(w, ((0, 0), (0, 0), (0, Cout_pad - Cout)))
    b = jnp.pad(bias, (0, Cout_pad - Cout)).reshape(1, Cout_pad)
    # TODO(synk): for very large Cin*Cout the resident (9, Cin, Cout_pad) weight
    # block should itself be tiled over Cout (third grid axis); not needed here.

    if compute_dtype is not None:
        # e.g. jnp.bfloat16 on v6e/v7x halves HBM bytes for the activation
        # stream; accumulation stays f32 via preferred_element_type.
        x_tiles = x_tiles.astype(compute_dtype)
        w = w.astype(compute_dtype)

    itemsize = jnp.dtype(x_nchw.dtype).itemsize
    cost = pl.CostEstimate(
        flops=2 * N * Ho_pad * Wo_pad * 9 * Cin * Cout_pad,
        transcendentals=0,
        bytes_accessed=(x_tiles.size + w.size + b.size
                        + N * Ho_pad * Wo_pad * Cout_pad) * itemsize,
    )

    out = pl.pallas_call(
        _make_kernel(TH, Wo_pad, Cin, Cout_pad),
        out_shape=jax.ShapeDtypeStruct((N, Ho_pad, Wo_pad, Cout_pad),
                                       x_nchw.dtype),
        grid_spec=pl.GridSpec(
            grid=(N, nT),
            in_specs=[
                # per-(batch, row-tile) parity-plane window
                pl.BlockSpec((None, None, 4, TH + 1, Wo_pad + 1, Cin),
                             lambda n, t: (n, t, 0, 0, 0, 0)),
                # weights / bias: constant index maps -> stay resident in VMEM
                pl.BlockSpec((9, Cin, Cout_pad), lambda n, t: (0, 0, 0)),
                pl.BlockSpec((1, Cout_pad), lambda n, t: (0, 0)),
            ],
            out_specs=pl.BlockSpec((None, TH, Wo_pad, Cout_pad),
                                   lambda n, t: (n, t, 0, 0)),
        ),
        compiler_params=pltpu.CompilerParams(
            # no cross-step carry: both axes parallel (v7x can shard over 2 TCs)
            dimension_semantics=("parallel", "parallel"),
        ),
        cost_estimate=cost,
    )(x_tiles, w, b)

    # strip channel / spatial padding, back to NCHW for the PyTorch interface
    out = out[:, :Ho, :Wo, :Cout]
    return jnp.transpose(out, (0, 3, 1, 2))


if __name__ == "__main__":
    key = jax.random.PRNGKey(0)
    k_x, k_w, k_b = jax.random.split(key, 3)

    N, Cin, H, W = 2, 4, 16, 16
    Cout = 8

    x = jax.random.normal(k_x, (N, Cin, H, W), dtype=jnp.float32)
    # deterministic init mimicking PyTorch's uniform(-1/sqrt(fan_in), 1/sqrt(fan_in))
    fan_in = Cin * 3 * 3
    bound = 1.0 / (fan_in ** 0.5)
    weight = jax.random.uniform(k_w, (Cout, Cin, 3, 3), jnp.float32, -bound, bound)
    bias = jax.random.uniform(k_b, (Cout,), jnp.float32, -bound, bound)

    out = jax.jit(downsample_conv)(x, weight, bias)
    out = jax.block_until_ready(out)

    # sanity check vs. XLA's conv (same semantics as torch Conv2d stride=2 pad=1)
    ref = jax.lax.conv_general_dilated(
        x, weight, window_strides=(2, 2), padding=((1, 1), (1, 1)),
        dimension_numbers=("NCHW", "OIHW", "NCHW"),
    ) + bias.reshape(1, Cout, 1, 1)
    assert out.shape == (N, Cout, 8, 8), out.shape
    assert jnp.allclose(out, ref, atol=1e-4, rtol=1e-4)

    print("KERNEL_OK")
</pallas_src>

<mosaic_0001>
module attributes {stable_mosaic.version = 11 : i64} {
  func.func @kernel(%arg0: i32, %arg1: i32, %arg2: memref<1x1x4x9x9x4xf32, #tpu.memory_space<vmem>>, %arg3: memref<9x4x128xf32, #tpu.memory_space<vmem>>, %arg4: memref<1x128xf32, #tpu.memory_space<vmem>>, %arg5: memref<1x8x8x128xf32, #tpu.memory_space<vmem>>) attributes {dimension_semantics = [#tpu.dimension_semantics<parallel>, #tpu.dimension_semantics<parallel>], iteration_bounds = array<i64: 2, 1>, scalar_prefetch = 0 : i64, scratch_operands = 0 : i64, tpu.core_type = #tpu.core_type<tc>, window_params = [{transform_indices = @transform_0, window_bounds = array<i64: 1, 1, 4, 9, 9, 4>}, {pipeline_mode = #tpu.pipeline_mode<synchronous>, transform_indices = @transform_1, window_bounds = array<i64: 9, 4, 128>}, {pipeline_mode = #tpu.pipeline_mode<synchronous>, transform_indices = @transform_2, window_bounds = array<i64: 1, 128>}, {transform_indices = @transform_3, window_bounds = array<i64: 1, 8, 8, 128>}]} {
    %cst = arith.constant 0.000000e+00 : f32
    %0 = vector.broadcast %cst : f32 to vector<64x128xf32>
    %c0 = arith.constant 0 : index
    %c0_0 = arith.constant 0 : index
    %c0_1 = arith.constant 0 : index
    %c0_2 = arith.constant 0 : index
    %c0_3 = arith.constant 0 : index
    %c0_4 = arith.constant 0 : index
    %1 = vector.load %arg2[%c0, %c0_0, %c0_1, %c0_2, %c0_3, %c0_4] : memref<1x1x4x9x9x4xf32, #tpu.memory_space<vmem>>, vector<1x1x1x8x8x4xf32>
    %2 = vector.shape_cast %1 : vector<1x1x1x8x8x4xf32> to vector<8x8x4xf32>
    %3 = vector.shape_cast %2 : vector<8x8x4xf32> to vector<64x4xf32>
    %c0_5 = arith.constant 0 : index
    %c0_6 = arith.constant 0 : index
    %c0_7 = arith.constant 0 : index
    %4 = vector.load %arg3[%c0_5, %c0_6, %c0_7] : memref<9x4x128xf32, #tpu.memory_space<vmem>>, vector<1x4x128xf32>
    %5 = vector.shape_cast %4 : vector<1x4x128xf32> to vector<4x128xf32>
    %cst_8 = arith.constant dense<0.000000e+00> : vector<64x128xf32>
    %6 = tpu.matmul %3, %5, %cst_8 {dimension_numbers = #tpu.dot_dimension_numbers<[1], [0], [0], [1], [0, 0, 1, 1], [], []>} : vector<64x4xf32>, vector<4x128xf32>, vector<64x128xf32> -> vector<64x128xf32>
    %7 = arith.addf %0, %6 : vector<64x128xf32>
    %c0_9 = arith.constant 0 : index
    %c0_10 = arith.constant 0 : index
    %c1 = arith.constant 1 : index
    %c0_11 = arith.constant 0 : index
    %c0_12 = arith.constant 0 : index
    %c0_13 = arith.constant 0 : index
    %8 = vector.load %arg2[%c0_9, %c0_10, %c1, %c0_11, %c0_12, %c0_13] : memref<1x1x4x9x9x4xf32, #tpu.memory_space<vmem>>, vector<1x1x1x8x8x4xf32>
    %9 = vector.shape_cast %8 : vector<1x1x1x8x8x4xf32> to vector<8x8x4xf32>
    %10 = vector.shape_cast %9 : vector<8x8x4xf32> to vector<64x4xf32>
    %c1_14 = arith.constant 1 : index
    %c0_15 = arith.constant 0 : index
    %c0_16 = arith.constant 0 : index
    %11 = vector.load %arg3[%c1_14, %c0_15, %c0_16] : memref<9x4x128xf32, #tpu.memory_space<vmem>>, vector<1x4x128xf32>
    %12 = vector.shape_cast %11 : vector<1x4x128xf32> to vector<4x128xf32>
    %cst_17 = arith.constant dense<0.000000e+00> : vector<64x128xf32>
    %13 = tpu.matmul %10, %12, %cst_17 {dimension_numbers = #tpu.dot_dimension_numbers<[1], [0], [0], [1], [0, 0, 1, 1], [], []>} : vector<64x4xf32>, vector<4x128xf32>, vector<64x128xf32> -> vector<64x128xf32>
    %14 = arith.addf %7, %13 : vector<64x128xf32>
    %c0_18 = arith.constant 0 : index
    %c0_19 = arith.constant 0 : index
    %c0_20 = arith.constant 0 : index
    %c0_21 = arith.constant 0 : index
    %c1_22 = arith.constant 1 : index
    %c0_23 = arith.constant 0 : index
    %15 = vector.load %arg2[%c0_18, %c0_19, %c0_20, %c0_21, %c1_22, %c0_23] : memref<1x1x4x9x9x4xf32, #tpu.memory_space<vmem>>, vector<1x1x1x8x8x4xf32>
    %16 = vector.shape_cast %15 : vector<1x1x1x8x8x4xf32> to vector<8x8x4xf32>
    %17 = vector.shape_cast %16 : vector<8x8x4xf32> to vector<64x4xf32>
    %c2 = arith.constant 2 : index
    %c0_24 = arith.constant 0 : index
    %c0_25 = arith.constant 0 : index
    %18 = vector.load %arg3[%c2, %c0_24, %c0_25] : memref<9x4x128xf32, #tpu.memory_space<vmem>>, vector<1x4x128xf32>
    %19 = vector.shape_cast %18 : vector<1x4x128xf32> to vector<4x128xf32>
    %cst_26 = arith.constant dense<0.000000e+00> : vector<64x128xf32>
    %20 = tpu.matmul %17, %19, %cst_26 {dimension_numbers = #tpu.dot_dimension_numbers<[1], [0], [0], [1], [0, 0, 1, 1], [], []>} : vector<64x4xf32>, vector<4x128xf32>, vector<64x128xf32> -> vector<64x128xf32>
    %21 = arith.addf %14, %20 : vector<64x128xf32>
    %c0_27 = arith.constant 0 : index
    %c0_28 = arith.constant 0 : index
    %c2_29 = arith.constant 2 : index
    %c0_30 = arith.constant 0 : index
    %c0_31 = arith.constant 0 : index
    %c0_32 = arith.constant 0 : index
    %22 = vector.load %arg2[%c0_27, %c0_28, %c2_29, %c0_30, %c0_31, %c0_32] : memref<1x1x4x9x9x4xf32, #tpu.memory_space<vmem>>, vector<1x1x1x8x8x4xf32>
    %23 = vector.shape_cast %22 : vector<1x1x1x8x8x4xf32> to vector<8x8x4xf32>
    %24 = vector.shape_cast %23 : vector<8x8x4xf32> to vector<64x4xf32>
    %c3 = arith.constant 3 : index
    %c0_33 = arith.constant 0 : index
    %c0_34 = arith.constant 0 : index
    %25 = vector.load %arg3[%c3, %c0_33, %c0_34] : memref<9x4x128xf32, #tpu.memory_space<vmem>>, vector<1x4x128xf32>
    %26 = vector.shape_cast %25 : vector<1x4x128xf32> to vector<4x128xf32>
    %cst_35 = arith.constant dense<0.000000e+00> : vector<64x128xf32>
    %27 = tpu.matmul %24, %26, %cst_35 {dimension_numbers = #tpu.dot_dimension_numbers<[1], [0], [0], [1], [0, 0, 1, 1], [], []>} : vector<64x4xf32>, vector<4x128xf32>, vector<64x128xf32> -> vector<64x128xf32>
    %28 = arith.addf %21, %27 : vector<64x128xf32>
    %c0_36 = arith.constant 0 : index
    %c0_37 = arith.constant 0 : index
    %c3_38 = arith.constant 3 : index
    %c0_39 = arith.constant 0 : index
    %c0_40 = arith.constant 0 : index
    %c0_41 = arith.constant 0 : index
    %29 = vector.load %arg2[%c0_36, %c0_37, %c3_38, %c0_39, %c0_40, %c0_41] : memref<1x1x4x9x9x4xf32, #tpu.memory_space<vmem>>, vector<1x1x1x8x8x4xf32>
    %30 = vector.shape_cast %29 : vector<1x1x1x8x8x4xf32> to vector<8x8x4xf32>
    %31 = vector.shape_cast %30 : vector<8x8x4xf32> to vector<64x4xf32>
    %c4 = arith.constant 4 : index
    %c0_42 = arith.constant 0 : index
    %c0_43 = arith.constant 0 : index
    %32 = vector.load %arg3[%c4, %c0_42, %c0_43] : memref<9x4x128xf32, #tpu.memory_space<vmem>>, vector<1x4x128xf32>
    %33 = vector.shape_cast %32 : vector<1x4x128xf32> to vector<4x128xf32>
    %cst_44 = arith.constant dense<0.000000e+00> : vector<64x128xf32>
    %34 = tpu.matmul %31, %33, %cst_44 {dimension_numbers = #tpu.dot_dimension_numbers<[1], [0], [0], [1], [0, 0, 1, 1], [], []>} : vector<64x4xf32>, vector<4x128xf32>, vector<64x128xf32> -> vector<64x128xf32>
    %35 = arith.addf %28, %34 : vector<64x128xf32>
    %c0_45 = arith.constant 0 : index
    %c0_46 = arith.constant 0 : index
    %c2_47 = arith.constant 2 : index
    %c0_48 = arith.constant 0 : index
    %c1_49 = arith.constant 1 : index
    %c0_50 = arith.constant 0 : index
    %36 = vector.load %arg2[%c0_45, %c0_46, %c2_47, %c0_48, %c1_49, %c0_50] : memref<1x1x4x9x9x4xf32, #tpu.memory_space<vmem>>, vector<1x1x1x8x8x4xf32>
    %37 = vector.shape_cast %36 : vector<1x1x1x8x8x4xf32> to vector<8x8x4xf32>
    %38 = vector.shape_cast %37 : vector<8x8x4xf32> to vector<64x4xf32>
    %c5 = arith.constant 5 : index
    %c0_51 = arith.constant 0 : index
    %c0_52 = arith.constant 0 : index
    %39 = vector.load %arg3[%c5, %c0_51, %c0_52] : memref<9x4x128xf32, #tpu.memory_space<vmem>>, vector<1x4x128xf32>
    %40 = vector.shape_cast %39 : vector<1x4x128xf32> to vector<4x128xf32>
    %cst_53 = arith.constant dense<0.000000e+00> : vector<64x128xf32>
    %41 = tpu.matmul %38, %40, %cst_53 {dimension_numbers = #tpu.dot_dimension_numbers<[1], [0], [0], [1], [0, 0, 1, 1], [], []>} : vector<64x4xf32>, vector<4x128xf32>, vector<64x128xf32> -> vector<64x128xf32>
    %42 = arith.addf %35, %41 : vector<64x128xf32>
    %c0_54 = arith.constant 0 : index
    %c0_55 = arith.constant 0 : index
    %c0_56 = arith.constant 0 : index
    %c1_57 = arith.constant 1 : index
    %c0_58 = arith.constant 0 : index
    %c0_59 = arith.constant 0 : index
    %43 = vector.load %arg2[%c0_54, %c0_55, %c0_56, %c1_57, %c0_58, %c0_59] : memref<1x1x4x9x9x4xf32, #tpu.memory_space<vmem>>, vector<1x1x1x8x8x4xf32>
    %44 = vector.shape_cast %43 : vector<1x1x1x8x8x4xf32> to vector<8x8x4xf32>
    %45 = vector.shape_cast %44 : vector<8x8x4xf32> to vector<64x4xf32>
    %c6 = arith.constant 6 : index
    %c0_60 = arith.constant 0 : index
    %c0_61 = arith.constant 0 : index
    %46 = vector.load %arg3[%c6, %c0_60, %c0_61] : memref<9x4x128xf32, #tpu.memory_space<vmem>>, vector<1x4x128xf32>
    %47 = vector.shape_cast %46 : vector<1x4x128xf32> to vector<4x128xf32>
    %cst_62 = arith.constant dense<0.000000e+00> : vector<64x128xf32>
    %48 = tpu.matmul %45, %47, %cst_62 {dimension_numbers = #tpu.dot_dimension_numbers<[1], [0], [0], [1], [0, 0, 1, 1], [], []>} : vector<64x4xf32>, vector<4x128xf32>, vector<64x128xf32> -> vector<64x128xf32>
    %49 = arith.addf %42, %48 : vector<64x128xf32>
    %c0_63 = arith.constant 0 : index
    %c0_64 = arith.constant 0 : index
    %c1_65 = arith.constant 1 : index
    %c1_66 = arith.constant 1 : index
    %c0_67 = arith.constant 0 : index
    %c0_68 = arith.constant 0 : index
    %50 = vector.load %arg2[%c0_63, %c0_64, %c1_65, %c1_66, %c0_67, %c0_68] : memref<1x1x4x9x9x4xf32, #tpu.memory_space<vmem>>, vector<1x1x1x8x8x4xf32>
    %51 = vector.shape_cast %50 : vector<1x1x1x8x8x4xf32> to vector<8x8x4xf32>
    %52 = vector.shape_cast %51 : vector<8x8x4xf32> to vector<64x4xf32>
    %c7 = arith.constant 7 : index
    %c0_69 = arith.constant 0 : index
    %c0_70 = arith.constant 0 : index
    %53 = vector.load %arg3[%c7, %c0_69, %c0_70] : memref<9x4x128xf32, #tpu.memory_space<vmem>>, vector<1x4x128xf32>
    %54 = vector.shape_cast %53 : vector<1x4x128xf32> to vector<4x128xf32>
    %cst_71 = arith.constant dense<0.000000e+00> : vector<64x128xf32>
    %55 = tpu.matmul %52, %54, %cst_71 {dimension_numbers = #tpu.dot_dimension_numbers<[1], [0], [0], [1], [0, 0, 1, 1], [], []>} : vector<64x4xf32>, vector<4x128xf32>, vector<64x128xf32> -> vector<64x128xf32>
    %56 = arith.addf %49, %55 : vector<64x128xf32>
    %c0_72 = arith.constant 0 : index
    %c0_73 = arith.constant 0 : index
    %c0_74 = arith.constant 0 : index
    %c1_75 = arith.constant 1 : index
    %c1_76 = arith.constant 1 : index
    %c0_77 = arith.constant 0 : index
    %57 = vector.load %arg2[%c0_72, %c0_73, %c0_74, %c1_75, %c1_76, %c0_77] : memref<1x1x4x9x9x4xf32, #tpu.memory_space<vmem>>, vector<1x1x1x8x8x4xf32>
    %58 = vector.shape_cast %57 : vector<1x1x1x8x8x4xf32> to vector<8x8x4xf32>
    %59 = vector.shape_cast %58 : vector<8x8x4xf32> to vector<64x4xf32>
    %c8 = arith.constant 8 : index
    %c0_78 = arith.constant 0 : index
    %c0_79 = arith.constant 0 : index
    %60 = vector.load %arg3[%c8, %c0_78, %c0_79] : memref<9x4x128xf32, #tpu.memory_space<vmem>>, vector<1x4x128xf32>
    %61 = vector.shape_cast %60 : vector<1x4x128xf32> to vector<4x128xf32>
    %cst_80 = arith.constant dense<0.000000e+00> : vector<64x128xf32>
    %62 = tpu.matmul %59, %61, %cst_80 {dimension_numbers = #tpu.dot_dimension_numbers<[1], [0], [0], [1], [0, 0, 1, 1], [], []>} : vector<64x4xf32>, vector<4x128xf32>, vector<64x128xf32> -> vector<64x128xf32>
    %63 = arith.addf %56, %62 : vector<64x128xf32>
    %c0_81 = arith.constant 0 : index
    %c0_82 = arith.constant 0 : index
    %64 = vector.load %arg4[%c0_81, %c0_82] : memref<1x128xf32, #tpu.memory_space<vmem>>, vector<1x128xf32>
    %65 = vector.broadcast %64 : vector<1x128xf32> to vector<64x128xf32>
    %66 = arith.addf %63, %65 : vector<64x128xf32>
    %67 = vector.shape_cast %66 : vector<64x128xf32> to vector<8x8x128xf32>
    %c0_83 = arith.constant 0 : index
    %c0_84 = arith.constant 0 : index
    %c0_85 = arith.constant 0 : index
    %c0_86 = arith.constant 0 : index
    %68 = vector.load %arg5[%c0_83, %c0_84, %c0_85, %c0_86] : memref<1x8x8x128xf32, #tpu.memory_space<vmem>>, vector<1x8x8x128xf32>
    %69 = vector.shape_cast %68 : vector<1x8x8x128xf32> to vector<8x8x128xf32>
    %70 = vector.shape_cast %67 : vector<8x8x128xf32> to vector<1x8x8x128xf32>
    tpu.vector_store %arg5[%c0_83, %c0_84, %c0_85, %c0_86], %70 {strides = array<i32>} : memref<1x8x8x128xf32, #tpu.memory_space<vmem>>, vector<1x8x8x128xf32>,
    return
  }
  func.func @transform_0(%arg0: i32, %arg1: i32) -> (i32, i32, i32, i32, i32, i32) {
    %c0_i32 = arith.constant 0 : i32
    %c0_i32_0 = arith.constant 0 : i32
    %c0_i32_1 = arith.constant 0 : i32
    %c0_i32_2 = arith.constant 0 : i32
    %c0_i32_3 = arith.constant 0 : i32
    return %arg0, %arg1, %c0_i32, %c0_i32_0, %c0_i32_1, %c0_i32_2 : i32, i32, i32, i32, i32, i32
  }
  func.func @transform_1(%arg0: i32, %arg1: i32) -> (i32, i32, i32) {
    %c0_i32 = arith.constant 0 : i32
    %c0_i32_0 = arith.constant 0 : i32
    %c0_i32_1 = arith.constant 0 : i32
    %c0_i32_2 = arith.constant 0 : i32
    return %c0_i32, %c0_i32_0, %c0_i32_1 : i32, i32, i32
  }
  func.func @transform_2(%arg0: i32, %arg1: i32) -> (i32, i32) {
    %c0_i32 = arith.constant 0 : i32
    %c0_i32_0 = arith.constant 0 : i32
    %c0_i32_1 = arith.constant 0 : i32
    return %c0_i32, %c0_i32_0 : i32, i32
  }
  func.func @transform_3(%arg0: i32, %arg1: i32) -> (i32, i32, i32, i32) {
    %c0_i32 = arith.constant 0 : i32
    %c0_i32_0 = arith.constant 0 : i32
    %c0_i32_1 = arith.constant 0 : i32
    return %arg0, %arg1, %c0_i32, %c0_i32_0 : i32, i32, i32, i32
  }
}

</mosaic_0001>

<llo_original>
// kernel: downsample_conv.1
$region0: #{downsample_conv.1}
  #allocation0 [shape = 'u32[]', space=smem, size = 0x4, offset = 0x4, fixed_abs, tag = 'smem constant byte address 0x4 - core index']
  #allocation1 [shape = 'u32[144,128]{1,0:T(1,128)}', space=vmem, size = 0x12000, scoped, tag = 'internal scratch']
  %s0 = inlined_call_operand.vmem [shape: f32[2,1,4,9,9,4], index: 0, kind: input, shape index: {}]
  %s1 = inlined_call_operand.vmem [shape: f32[9,4,128], index: 1, kind: input, shape index: {}]
  %s2 = inlined_call_operand.vmem [shape: f32[1,128], index: 2, kind: input, shape index: {}]
  %s3 = inlined_call_operand.vmem [shape: f32[2,8,8,128], index: 3, kind: output, shape index: {}]
  %s4 = sld [smem:[#allocation0]]
  $region45: #{downsample_conv.1} parent=0
    _
  %s6 = ssub.s32 1, %s4
  %s7 = scalar_select 0, %s6, %s4
  loop: start=0, step=1, limit=4
  $region2: #{downsample_conv.1} parent=0 // loop_pre_header
    _
  $region3: #{downsample_conv.1} parent=0 // loop_header
    %s9 = sphi 0, %s13
    %p10 = scmp.ge.s32.totalorder %s9, 4
    %s16 = sphi 0, %s28
    %s17 = sphi 0, %s24
    %s18 = sphi 0, %s16
    %s19 = sphi 0, %s17
    %s20 = sphi 0, %s18
    %s21 = sphi 0, %s19
    %s33 = sphi 0, %s35
    %s36 = sphi 0, %s33
    %s37 = sphi 0, %s36
    %s53 = sphi 0, %s37
    %s57 = sphi 0, %s57
    %s59 = sphi 0, %s57
    %s60 = sphi 0, %s59
    %s74 = sphi 0, %s60
    %s78 = sphi 0, %s78
    %s80 = sphi 0, %s78
    %s81 = sphi 0, %s80
    %s95 = sphi 0, %s81
    %s103 = sphi 0, %s105
    %s106 = sphi 0, %s103
    %s107 = sphi 0, %s106
    %s123 = sphi 0, %s107
  $region4: #{downsample_conv.1} parent=0 // loop_header_branch
    %12 = sbr.rel (%p10) target = $region8
  $region5: #{downsample_conv.1} parent=0 // loop_body
    %s14 = ssub.s32 %s9, 1
    %s15 = ssub.s32 %s9, 2
    %s22 = sadd.s32 1, %s17
    %p23 = scmp.ge.s32.totalorder %s22, 1
    %s24 = scalar_select %p23, 0, %s22
    %s25 = sadd.s32 1, %s16
    %s26 = scalar_select %p23, %s25, %s16
    %p27 = scmp.ge.s32.totalorder %s26, 2
    %s28 = scalar_select %p27, 0, %s26
    %s29 = ssub.s32 %s16, %s28
    %s30 = ssub.s32 %s17, %s24
    %s31 = sor.u32 %s29, %s30
    %p32 = scmp.eq.s32.totalorder %s31, 0
    %s34 = sadd.s32 %s33, 1
    %s35 = scalar_select %p32, %s33, %s34
    %p38 = pneg %p32
    %p39 = scmp.eq.s32.totalorder %s9, 1
    %p40 = por %p38, %p39
    %p41 = scmp.ne.s32.totalorder %s33, %s36
    %p42 = scmp.eq.s32.totalorder %s9, 0
    %p43 = por %p41, %p42
    %p44 = scmp.ne.s32.totalorder %s33, %s36
    %p45 = scmp.eq.s32.totalorder %s14, 1
    %p46 = por %p44, %p45
    %p47 = scmp.ne.s32.totalorder %s36, %s37
    %p48 = scmp.eq.s32.totalorder %s14, 0
    %p49 = por %p47, %p48
    %p50 = scmp.ne.s32.totalorder %s36, %s37
    %p51 = scmp.eq.s32.totalorder %s15, 1
    %p52 = por %p50, %p51
    %p54 = scmp.ne.s32.totalorder %s37, %s53
    %p55 = scmp.eq.s32.totalorder %s15, 0
    %p56 = por %p54, %p55
    %s58 = sadd.s32 %s57, 1
    %p61 = scmp.eq.s32.totalorder %s9, 1
    %p62 = scmp.ne.s32.totalorder %s57, %s59
    %p63 = scmp.eq.s32.totalorder %s9, 0
    %p64 = por %p62, %p63
    %p65 = scmp.ne.s32.totalorder %s57, %s59
    %p66 = scmp.eq.s32.totalorder %s14, 1
    %p67 = por %p65, %p66
    %p68 = scmp.ne.s32.totalorder %s59, %s60
    %p69 = scmp.eq.s32.totalorder %s14, 0
    %p70 = por %p68, %p69
    %p71 = scmp.ne.s32.totalorder %s59, %s60
    %p72 = scmp.eq.s32.totalorder %s15, 1
    %p73 = por %p71, %p72
    %p75 = scmp.ne.s32.totalorder %s60, %s74
    %p76 = scmp.eq.s32.totalorder %s15, 0
    %p77 = por %p75, %p76
    %s79 = sadd.s32 %s78, 1
    %p82 = scmp.eq.s32.totalorder %s9, 1
    %p83 = scmp.ne.s32.totalorder %s78, %s80
    %p84 = scmp.eq.s32.totalorder %s9, 0
    %p85 = por %p83, %p84
    %p86 = scmp.ne.s32.totalorder %s78, %s80
    %p87 = scmp.eq.s32.totalorder %s14, 1
    %p88 = por %p86, %p87
    %p89 = scmp.ne.s32.totalorder %s80, %s81
    %p90 = scmp.eq.s32.totalorder %s14, 0
    %p91 = por %p89, %p90
    %p92 = scmp.ne.s32.totalorder %s80, %s81
    %p93 = scmp.eq.s32.totalorder %s15, 1
    %p94 = por %p92, %p93
    %p96 = scmp.ne.s32.totalorder %s81, %s95
    %p97 = scmp.eq.s32.totalorder %s15, 0
    %p98 = por %p96, %p97
    %s99 = ssub.s32 %s16, %s28
    %s100 = ssub.s32 %s17, %s24
    %s101 = sor.u32 %s99, %s100
    %p102 = scmp.eq.s32.totalorder %s101, 0
    %s104 = sadd.s32 %s103, 1
    %s105 = scalar_select %p102, %s103, %s104
    %p108 = pneg %p102
    %p109 = scmp.eq.s32.totalorder %s9, 1
    %p110 = por %p108, %p109
    %p111 = scmp.ne.s32.totalorder %s103, %s106
    %p112 = scmp.eq.s32.totalorder %s9, 0
    %p113 = por %p111, %p112
    %p114 = scmp.ne.s32.totalorder %s103, %s106
    %p115 = scmp.eq.s32.totalorder %s14, 1
    %p116 = por %p114, %p115
    %p117 = scmp.ne.s32.totalorder %s106, %s107
    %p118 = scmp.eq.s32.totalorder %s14, 0
    %p119 = por %p117, %p118
    %p120 = scmp.ne.s32.totalorder %s106, %s107
    %p121 = scmp.eq.s32.totalorder %s15, 1
    %p122 = por %p120, %p121
    %p124 = scmp.ne.s32.totalorder %s107, %s123
    %p125 = scmp.eq.s32.totalorder %s15, 0
    %p126 = por %p124, %p125
    %p127 = scmp.le.s32.totalorder 1, %s9
    %p128 = scmp.lt.s32.totalorder %s9, 3
    %p129 = pnand %p127, %p128
    %p130 = pneg %p129
    // Predicated region
    $region9: #{downsample_conv.1} parent=5 // pred_check
      _
    $region10: #{downsample_conv.1} parent=5 // pred_check_branch
      %132 = sbr.rel (%p129) target = $region12
    $region11: #{downsample_conv.1} parent=5 // pred_region
      %s133 = ssub.s32 %s9, 1
      // Predicated region
      $region13: #{downsample_conv.1} parent=11 // pred_check
        %p134 = pneg %p70
      $region14: #{downsample_conv.1} parent=11 // pred_check_branch
        %136 = sbr.rel (%p134) target = $region16
      $region15: #{downsample_conv.1} parent=11 // pred_region
        _
      $region16: #{downsample_conv.1} parent=11 // pred_fallthru
        _
      // Predicated region
      $region17: #{downsample_conv.1} parent=11 // pred_check
        %p137 = pneg %p91
      $region18: #{downsample_conv.1} parent=11 // pred_check_branch
        %139 = sbr.rel (%p137) target = $region20
      $region19: #{downsample_conv.1} parent=11 // pred_region
        _
      $region20: #{downsample_conv.1} parent=11 // pred_fallthru
        _
    $region12: #{downsample_conv.1} parent=5 // pred_fallthru
      _
    %p140 = scmp.lt.s32.totalorder %s9, 2
    // Predicated region
    $region21: #{downsample_conv.1} parent=5 // pred_check
      %p141 = pneg %p140
    $region22: #{downsample_conv.1} parent=5 // pred_check_branch
      %143 = sbr.rel (%p141) target = $region24
    $region23: #{downsample_conv.1} parent=5 // pred_region
      // Predicated region
      $region25: #{downsample_conv.1} parent=23 // pred_check
        %p144 = pneg %p43
      $region26: #{downsample_conv.1} parent=23 // pred_check_branch
        %146 = sbr.rel (%p144) target = $region28
      $region27: #{downsample_conv.1} parent=23 // pred_region
        %p147 = scmp.lt.s32.totalorder %s16, 1
        %s148 = scalar_select %p147, %s16, 1
        %p149 = scmp.lt.s32.totalorder %s17, 0
        %s150 = scalar_select %p149, %s17, 0
        %s151 = smul.addr %s150, 72
        %s152 = smul.addr %s148, 72
        %s153 = sadd.s32 %s151, %s152
        %s154 = smul.addr %s153, 8
        %s155 = scalar_lea.vmem %s0, %s154
      $region28: #{downsample_conv.1} parent=23 // pred_fallthru
        _
    $region24: #{downsample_conv.1} parent=5 // pred_fallthru
      _
    %p156 = scmp.le.s32.totalorder 1, %s9
    %p157 = scmp.lt.s32.totalorder %s9, 3
    %p158 = pnand %p156, %p157
    %p159 = pneg %p158
    // Predicated region
    $region29: #{downsample_conv.1} parent=5 // pred_check
      _
    $region30: #{downsample_conv.1} parent=5 // pred_check_branch
      %161 = sbr.rel (%p158) target = $region32
    $region31: #{downsample_conv.1} parent=5 // pred_region
      %s162 = ssub.s32 %s9, 1
      %p163 = scmp.lt.s32.totalorder %s18, 1
      %s164 = scalar_select %p163, %s18, 1
      %p165 = scmp.lt.s32.totalorder %s19, 0
      %s166 = scalar_select %p165, %s19, 0
      %s167 = smul.addr %s166, 72
      %s168 = smul.addr %s164, 72
      %s169 = sadd.s32 %s167, %s168
      %s170 = smul.addr %s169, 8
      %s171 = scalar_lea.vmem %s0, %s170
      %p172 = pneg %p49
      %p173 = pneg %p46
      %p174 = pneg %p70
      %p175 = pneg %p67
      %p176 = pneg %p91
      %p177 = pneg %p88
      %p178 = pneg %p119
      %p179 = pneg %p116
      %s180 = smul.u32 8, %s19
      %p181 = scmp.lt.s32.totalorder %s18, 1
      %s182 = scalar_select %p181, %s18, 1
      %p183 = scmp.lt.s32.totalorder %s180, 7
      %s184 = scalar_select %p183, %s180, 7
      %s185 = smul.addr %s182, 8
      %s186 = sadd.s32 %s184, %s185
      %s187 = smul.addr %s186, 8
      %s188 = scalar_lea.vmem %s3, %s187
      %p189 = scmp.lt.s32.totalorder %s18, 1
      %s190 = scalar_select %p189, %s18, 1
      %p191 = scmp.lt.s32.totalorder %s19, 0
      %s192 = scalar_select %p191, %s19, 0
      %s193 = smul.addr %s192, 72
      %s194 = smul.addr %s190, 72
      %s195 = sadd.s32 %s193, %s194
      %s196 = smul.addr %s195, 8
      %s197 = scalar_lea.vmem %s0, %s196
      %s198 = smul.u32 8, %s19
      %p199 = scmp.lt.s32.totalorder %s18, 1
      %s200 = scalar_select %p199, %s18, 1
      %p201 = scmp.lt.s32.totalorder %s198, 7
      %s202 = scalar_select %p201, %s198, 7
      %s203 = smul.addr %s200, 8
      %s204 = sadd.s32 %s202, %s203
      %s205 = smul.addr %s204, 8
      %s206 = scalar_lea.vmem %s3, %s205
      %s207 = smul.u32 8, %s19
      %v208 = vld [vmem:[%s197] sm:$0xff]
      %v209 = vld [vmem:[%s197 + $0x10] sm:$0xff]
      %v210 = vld [vmem:[%s197 + $0x20] sm:$0xff]
      %v211 = vld [vmem:[%s197 + $0x30] sm:$0xff]
      %v212 = vld [vmem:[%s197 + $0x40] sm:$0xff]
      %v213 = vld [vmem:[%s197 + $0x50] sm:$0xff]
      %v214 = vld [vmem:[%s197 + $0x60] sm:$0xff]
      %v215 = vld [vmem:[%s197 + $0x70] sm:$0xff]
      %v216 = vld [vmem:[%s1] sm:$0xf]
      %s217 = scalar_lea.vmem %s197, 144
      %v218 = vld [vmem:[%s217] sm:$0xff]
      %v219 = vld [vmem:[%s217 + $0x10] sm:$0xff]
      %v220 = vld [vmem:[%s217 + $0x20] sm:$0xff]
      %v221 = vld [vmem:[%s217 + $0x30] sm:$0xff]
      %v222 = vld [vmem:[%s217 + $0x40] sm:$0xff]
      %v223 = vld [vmem:[%s217 + $0x50] sm:$0xff]
      %v224 = vld [vmem:[%s217 + $0x60] sm:$0xff]
      %v225 = vld [vmem:[%s217 + $0x70] sm:$0xff]
      %s226 = scalar_lea.vmem %s1, 4
      %v227 = vld [vmem:[%s226] sm:$0xf]
      %vm228 = vcmask 31744
      %v230 = vsel %vm228, %v218, 0
      %v233 = vsel %vm228, %v219, 0
      %v236 = vsel %vm228, %v220, 0
      %v239 = vsel %vm228, %v221, 0
      %v242 = vsel %vm228, %v222, 0
      %v245 = vsel %vm228, %v223, 0
      %v248 = vsel %vm228, %v224, 0
      %v251 = vsel %vm228, %v225, 0
      %vm253 = vcmask 1043456
      %v255 = vsel %vm253, %v227, 0
      %257 = vmatprep.subr.mxu0 0.0
      %258 = vmatpush1.msra.mxu0 %v255
      %259 = vmatprep.subr.mxu0 0.0
      %260 = vmatpush1.msra.mxu0 0.0
      %261 = vmatprep.subr.mxu0 0.0
      %262 = vmatpush1.msra.mxu0 0.0
      %263 = vmatprep.subr.mxu0 0.0
      %264 = vmatpush1.msra.mxu0 0.0
      %265 = vmatprep.subr.mxu0 0.0
      %266 = vmatpush1.msra.mxu0 0.0
      %267 = vmatprep.subr.mxu0 0.0
      %268 = vmatpush1.msra.mxu0 0.0
      %269 = vmatprep.subr.mxu0 0.0
      %270 = vmatpush1.msra.mxu0 0.0
      %271 = vmatprep.subr.mxu0 0.0
      %272 = vmatpush1.msra.mxu0 0.0
      %273 = vmatprep.subr.mxu0 0.0
      %274 = vmatpush1.msra.mxu0 0.0
      %275 = vmatprep.subr.mxu0 0.0
      %276 = vmatpush1.msra.mxu0 0.0
      %277 = vmatprep.subr.mxu0 0.0
      %278 = vmatpush1.msra.mxu0 0.0
      %279 = vmatprep.subr.mxu0 0.0
      %280 = vmatpush1.msra.mxu0 0.0
      %281 = vmatprep.subr.mxu0 0.0
      %282 = vmatpush1.msra.mxu0 0.0
      %283 = vmatprep.subr.mxu0 0.0
      %284 = vmatpush1.msra.mxu0 0.0
      %285 = vmatprep.subr.mxu0 0.0
      %286 = vmatpush1.msra.mxu0 0.0
      %287 = vmatprep.subr.mxu0 0.0
      %288 = vmatpush1.msra.mxu0 0.0
      %289 = vmatprep.subr.mxu0 0.0
      %290 = vmatpush1.msra.mxu0 0.0
      %291 = vmatprep.subr.mxu0 0.0
      %292 = vmatpush1.msra.mxu0 0.0
      %293 = vmatprep.subr.mxu0 0.0
      %294 = vmatpush1.msra.mxu0 0.0
      %295 = vmatprep.subr.mxu0 0.0
      %296 = vmatpush1.msra.mxu0 0.0
      %297 = vmatprep.subr.mxu0 0.0
      %298 = vmatpush1.msra.mxu0 0.0
      %299 = vmatprep.subr.mxu0 0.0
      %300 = vmatpush1.msra.mxu0 0.0
      %301 = vmatprep.subr.mxu0 0.0
      %302 = vmatpush1.msra.mxu0 0.0
      %303 = vmatprep.subr.mxu0 0.0
      %304 = vmatpush1.msra.mxu0 0.0
      %305 = vmatprep.subr.mxu0 0.0
      %306 = vmatpush1.msra.mxu0 0.0
      %307 = vmatprep.subr.mxu0 0.0
      %308 = vmatpush1.msra.mxu0 0.0
      %309 = vmatprep.subr.mxu0 0.0
      %310 = vmatpush1.msra.mxu0 0.0
      %311 = vmatprep.subr.mxu0 0.0
      %312 = vmatpush1.msra.mxu0 0.0
      %313 = vmatprep.subr.mxu0 0.0
      %314 = vmatpush1.msra.mxu0 0.0
      %315 = vmatprep.subr.mxu0 0.0
      %316 = vmatpush1.msra.mxu0 0.0
      %317 = vmatprep.subr.mxu0 0.0
      %318 = vmatpush1.msra.mxu0 0.0
      %319 = vmatprep.subr.mxu0 0.0
      %320 = vmatpush1.msra.mxu0 0.0
      %321 = vmatprep.mubr.f32.mxu0 0.0
      %322 = vmatmul.mubr.f32.gmra.mrb[0].mxu0 %v230
      %v323 = vpop.f32.mrb[0].mxu0
      %v324 = vadd.f32 0.0, %v323
      %v325 = vpop.f32.mrb[0].mxu0
      %326 = vmatprep.mubr.f32.mxu0 0.0
      %327 = vmatmul.mubr.f32.gmra.mrb[0].mxu0 %v233
      %v328 = vpop.f32.mrb[0].mxu0
      %v329 = vadd.f32 0.0, %v328
      %v330 = vpop.f32.mrb[0].mxu0
      %331 = vmatprep.mubr.f32.mxu0 0.0
      %332 = vmatmul.mubr.f32.gmra.mrb[0].mxu0 %v236
      %v333 = vpop.f32.mrb[0].mxu0
      %v334 = vadd.f32 0.0, %v333
      %v335 = vpop.f32.mrb[0].mxu0
      %336 = vmatprep.mubr.f32.mxu0 0.0
      %337 = vmatmul.mubr.f32.gmra.mrb[0].mxu0 %v239
      %v338 = vpop.f32.mrb[0].mxu0
      %v339 = vadd.f32 0.0, %v338
      %v340 = vpop.f32.mrb[0].mxu0
      %341 = vmatprep.mubr.f32.mxu0 0.0
      %342 = vmatmul.mubr.f32.gmra.mrb[0].mxu0 %v242
      %v343 = vpop.f32.mrb[0].mxu0
      %v344 = vadd.f32 0.0, %v343
      %v345 = vpop.f32.mrb[0].mxu0
      %346 = vmatprep.mubr.f32.mxu0 0.0
      %347 = vmatmul.mubr.f32.gmra.mrb[0].mxu0 %v245
      %v348 = vpop.f32.mrb[0].mxu0
      %v349 = vadd.f32 0.0, %v348
      %v350 = vpop.f32.mrb[0].mxu0
      %351 = vmatprep.mubr.f32.mxu0 0.0
      %352 = vmatmul.mubr.f32.gmra.mrb[0].mxu0 %v248
      %v353 = vpop.f32.mrb[0].mxu0
      %v354 = vadd.f32 0.0, %v353
      %v355 = vpop.f32.mrb[0].mxu0
      %356 = vmatprep.mubr.f32.mxu0 0.0
      %357 = vmatmul.mubr.f32.gmra.mrb[0].mxu0 %v251
      %v358 = vpop.f32.mrb[0].mxu0
      %v359 = vadd.f32 0.0, %v358
      %v360 = vpop.f32.mrb[0].mxu0
      %361 = vdwg.mxu0
      %v363 = vsel %vm228, %v208, 0
      %v366 = vsel %vm228, %v209, 0
      %v369 = vsel %vm228, %v210, 0
      %v372 = vsel %vm228, %v211, 0
      %v375 = vsel %vm228, %v212, 0
      %v378 = vsel %vm228, %v213, 0
      %v381 = vsel %vm228, %v214, 0
      %v384 = vsel %vm228, %v215, 0
      %v387 = vsel %vm253, %v216, 0
      %389 = vmatprep.subr.mxu0 0.0
      %390 = vmatpush1.msra.mxu0 %v387
      %391 = vmatprep.subr.mxu0 0.0
      %392 = vmatpush1.msra.mxu0 0.0
      %393 = vmatprep.subr.mxu0 0.0
      %394 = vmatpush1.msra.mxu0 0.0
      %395 = vmatprep.subr.mxu0 0.0
      %396 = vmatpush1.msra.mxu0 0.0
      %397 = vmatprep.subr.mxu0 0.0
      %398 = vmatpush1.msra.mxu0 0.0
      %399 = vmatprep.subr.mxu0 0.0
      %400 = vmatpush1.msra.mxu0 0.0
      %401 = vmatprep.subr.mxu0 0.0
      %402 = vmatpush1.msra.mxu0 0.0
      %403 = vmatprep.subr.mxu0 0.0
      %404 = vmatpush1.msra.mxu0 0.0
      %405 = vmatprep.subr.mxu0 0.0
      %406 = vmatpush1.msra.mxu0 0.0
      %407 = vmatprep.subr.mxu0 0.0
      %408 = vmatpush1.msra.mxu0 0.0
      %409 = vmatprep.subr.mxu0 0.0
      %410 = vmatpush1.msra.mxu0 0.0
      %411 = vmatprep.subr.mxu0 0.0
      %412 = vmatpush1.msra.mxu0 0.0
      %413 = vmatprep.subr.mxu0 0.0
      %414 = vmatpush1.msra.mxu0 0.0
      %415 = vmatprep.subr.mxu0 0.0
      %416 = vmatpush1.msra.mxu0 0.0
      %417 = vmatprep.subr.mxu0 0.0
      %418 = vmatpush1.msra.mxu0 0.0
      %419 = vmatprep.subr.mxu0 0.0
      %420 = vmatpush1.msra.mxu0 0.0
      %421 = vmatprep.subr.mxu0 0.0
      %422 = vmatpush1.msra.mxu0 0.0
      %423 = vmatprep.subr.mxu0 0.0
      %424 = vmatpush1.msra.mxu0 0.0
      %425 = vmatprep.subr.mxu0 0.0
      %426 = vmatpush1.msra.mxu0 0.0
      %427 = vmatprep.subr.mxu0 0.0
      %428 = vmatpush1.msra.mxu0 0.0
      %429 = vmatprep.subr.mxu0 0.0
      %430 = vmatpush1.msra.mxu0 0.0
      %431 = vmatprep.subr.mxu0 0.0
      %432 = vmatpush1.msra.mxu0 0.0
      %433 = vmatprep.subr.mxu0 0.0
      %434 = vmatpush1.msra.mxu0 0.0
      %435 = vmatprep.subr.mxu0 0.0
      %436 = vmatpush1.msra.mxu0 0.0
      %437 = vmatprep.subr.mxu0 0.0
      %438 = vmatpush1.msra.mxu0 0.0
      %439 = vmatprep.subr.mxu0 0.0
      %440 = vmatpush1.msra.mxu0 0.0
      %441 = vmatprep.subr.mxu0 0.0
      %442 = vmatpush1.msra.mxu0 0.0
      %443 = vmatprep.subr.mxu0 0.0
      %444 = vmatpush1.msra.mxu0 0.0
      %445 = vmatprep.subr.mxu0 0.0
      %446 = vmatpush1.msra.mxu0 0.0
      %447 = vmatprep.subr.mxu0 0.0
      %448 = vmatpush1.msra.mxu0 0.0
      %449 = vmatprep.subr.mxu0 0.0
      %450 = vmatpush1.msra.mxu0 0.0
      %451 = vmatprep.subr.mxu0 0.0
      %452 = vmatpush1.msra.mxu0 0.0
      %453 = vmatprep.mubr.f32.mxu0 0.0
      %454 = vmatmul.mubr.f32.gmra.mrb[0].mxu0 %v363
      %v455 = vpop.f32.mrb[0].mxu0
      %v456 = vadd.f32 %v324, %v455
      %v457 = vpop.f32.mrb[0].mxu0
      %458 = vmatprep.mubr.f32.mxu0 0.0
      %459 = vmatmul.mubr.f32.gmra.mrb[0].mxu0 %v366
      %v460 = vpop.f32.mrb[0].mxu0
      %v461 = vadd.f32 %v329, %v460
      %v462 = vpop.f32.mrb[0].mxu0
      %463 = vmatprep.mubr.f32.mxu0 0.0
      %464 = vmatmul.mubr.f32.gmra.mrb[0].mxu0 %v369
      %v465 = vpop.f32.mrb[0].mxu0
      %v466 = vadd.f32 %v334, %v465
      %v467 = vpop.f32.mrb[0].mxu0
      %468 = vmatprep.mubr.f32.mxu0 0.0
      %469 = vmatmul.mubr.f32.gmra.mrb[0].mxu0 %v372
      %v470 = vpop.f32.mrb[0].mxu0
      %v471 = vadd.f32 %v339, %v470
      %v472 = vpop.f32.mrb[0].mxu0
      %473 = vmatprep.mubr.f32.mxu0 0.0
      %474 = vmatmul.mubr.f32.gmra.mrb[0].mxu0 %v375
      %v475 = vpop.f32.mrb[0].mxu0
      %v476 = vadd.f32 %v344, %v475
      %v477 = vpop.f32.mrb[0].mxu0
      %478 = vmatprep.mubr.f32.mxu0 0.0
      %479 = vmatmul.mubr.f32.gmra.mrb[0].mxu0 %v378
      %v480 = vpop.f32.mrb[0].mxu0
      %v481 = vadd.f32 %v349, %v480
      %v482 = vpop.f32.mrb[0].mxu0
      %483 = vmatprep.mubr.f32.mxu0 0.0
      %484 = vmatmul.mubr.f32.gmra.mrb[0].mxu0 %v381
      %v485 = vpop.f32.mrb[0].mxu0
      %v486 = vadd.f32 %v354, %v485
      %v487 = vpop.f32.mrb[0].mxu0
      %488 = vmatprep.mubr.f32.mxu0 0.0
      %489 = vmatmul.mubr.f32.gmra.mrb[0].mxu0 %v384
      %v490 = vpop.f32.mrb[0].mxu0
      %v491 = vadd.f32 %v359, %v490
      %v492 = vpop.f32.mrb[0].mxu0
      %493 = vdwg.mxu0
      %v494 = vld [vmem:[%s197 + $0x1] sm:$0xff]
      %v495 = vld [vmem:[%s197 + $0x11] sm:$0xff]
      %v496 = vld [vmem:[%s197 + $0x21] sm:$0xff]
      %v497 = vld [vmem:[%s197 + $0x31] sm:$0xff]
      %v498 = vld [vmem:[%s197 + $0x41] sm:$0xff]
      %v499 = vld [vmem:[%s197 + $0x51] sm:$0xff]
      %v500 = vld [vmem:[%s197 + $0x61] sm:$0xff]
      %v501 = vld [vmem:[%s197 + $0x71] sm:$0xff]
      %s502 = scalar_lea.vmem %s1, 8
      %v503 = vld [vmem:[%s502] sm:$0xf]
      %v505 = vsel %vm228, %v494, 0
      %v508 = vsel %vm228, %v495, 0
      %v511 = vsel %vm228, %v496, 0
      %v514 = vsel %vm228, %v497, 0
      %v517 = vsel %vm228, %v498, 0
      %v520 = vsel %vm228, %v499, 0
      %v523 = vsel %vm228, %v500, 0
      %v526 = vsel %vm228, %v501, 0
      %v529 = vsel %vm253, %v503, 0
      %531 = vmatprep.subr.mxu0 0.0
      %532 = vmatpush1.msra.mxu0 %v529
      %533 = vmatprep.subr.mxu0 0.0
      %534 = vmatpush1.msra.mxu0 0.0
      %535 = vmatprep.subr.mxu0 0.0
      %536 = vmatpush1.msra.mxu0 0.0
      %537 = vmatprep.subr.mxu0 0.0
      %538 = vmatpush1.msra.mxu0 0.0
      %539 = vmatprep.subr.mxu0 0.0
      %540 = vmatpush1.msra.mxu0 0.0
      %541 = vmatprep.subr.mxu0 0.0
      %542 = vmatpush1.msra.mxu0 0.0
      %543 = vmatprep.subr.mxu0 0.0
      %544 = vmatpush1.msra.mxu0 0.0
      %545 = vmatprep.subr.mxu0 0.0
      %546 = vmatpush1.msra.mxu0 0.0
      %547 = vmatprep.subr.mxu0 0.0
      %548 = vmatpush1.msra.mxu0 0.0
      %549 = vmatprep.subr.mxu0 0.0
      %550 = vmatpush1.msra.mxu0 0.0
      %551 = vmatprep.subr.mxu0 0.0
      %552 = vmatpush1.msra.mxu0 0.0
      %553 = vmatprep.subr.mxu0 0.0
      %554 = vmatpush1.msra.mxu0 0.0
      %555 = vmatprep.subr.mxu0 0.0
      %556 = vmatpush1.msra.mxu0 0.0
      %557 = vmatprep.subr.mxu0 0.0
      %558 = vmatpush1.msra.mxu0 0.0
      %559 = vmatprep.subr.mxu0 0.0
      %560 = vmatpush1.msra.mxu0 0.0
      %561 = vmatprep.subr.mxu0 0.0
      %562 = vmatpush1.msra.mxu0 0.0
      %563 = vmatprep.subr.mxu0 0.0
      %564 = vmatpush1.msra.mxu0 0.0
      %565 = vmatprep.subr.mxu0 0.0
      %566 = vmatpush1.msra.mxu0 0.0
      %567 = vmatprep.subr.mxu0 0.0
      %568 = vmatpush1.msra.mxu0 0.0
      %569 = vmatprep.subr.mxu0 0.0
      %570 = vmatpush1.msra.mxu0 0.0
      %571 = vmatprep.subr.mxu0 0.0
      %572 = vmatpush1.msra.mxu0 0.0
      %573 = vmatprep.subr.mxu0 0.0
      %574 = vmatpush1.msra.mxu0 0.0
      %575 = vmatprep.subr.mxu0 0.0
      %576 = vmatpush1.msra.mxu0 0.0
      %577 = vmatprep.subr.mxu0 0.0
      %578 = vmatpush1.msra.mxu0 0.0
      %579 = vmatprep.subr.mxu0 0.0
      %580 = vmatpush1.msra.mxu0 0.0
      %581 = vmatprep.subr.mxu0 0.0
      %582 = vmatpush1.msra.mxu0 0.0
      %583 = vmatprep.subr.mxu0 0.0
      %584 = vmatpush1.msra.mxu0 0.0
      %585 = vmatprep.subr.mxu0 0.0
      %586 = vmatpush1.msra.mxu0 0.0
      %587 = vmatprep.subr.mxu0 0.0
      %588 = vmatpush1.msra.mxu0 0.0
      %589 = vmatprep.subr.mxu0 0.0
      %590 = vmatpush1.msra.mxu0 0.0
      %591 = vmatprep.subr.mxu0 0.0
      %592 = vmatpush1.msra.mxu0 0.0
      %593 = vmatprep.subr.mxu0 0.0
      %594 = vmatpush1.msra.mxu0 0.0
      %595 = vmatprep.mubr.f32.mxu0 0.0
      %596 = vmatmul.mubr.f32.gmra.mrb[0].mxu0 %v505
      %v597 = vpop.f32.mrb[0].mxu0
      %v598 = vadd.f32 0.0, %v597
      %v599 = vpop.f32.mrb[0].mxu0
      %600 = vmatprep.mubr.f32.mxu0 0.0
      %601 = vmatmul.mubr.f32.gmra.mrb[0].mxu0 %v508
      %v602 = vpop.f32.mrb[0].mxu0
      %v603 = vadd.f32 0.0, %v602
      %v604 = vpop.f32.mrb[0].mxu0
      %605 = vmatprep.mubr.f32.mxu0 0.0
      %606 = vmatmul.mubr.f32.gmra.mrb[0].mxu0 %v511
      %v607 = vpop.f32.mrb[0].mxu0
      %v608 = vadd.f32 0.0, %v607
      %v609 = vpop.f32.mrb[0].mxu0
      %610 = vmatprep.mubr.f32.mxu0 0.0
      %611 = vmatmul.mubr.f32.gmra.mrb[0].mxu0 %v514
      %v612 = vpop.f32.mrb[0].mxu0
      %v613 = vadd.f32 0.0, %v612
      %v614 = vpop.f32.mrb[0].mxu0
      %615 = vmatprep.mubr.f32.mxu0 0.0
      %616 = vmatmul.mubr.f32.gmra.mrb[0].mxu0 %v517
      %v617 = vpop.f32.mrb[0].mxu0
      %v618 = vadd.f32 0.0, %v617
      %v619 = vpop.f32.mrb[0].mxu0
      %620 = vmatprep.mubr.f32.mxu0 0.0
      %621 = vmatmul.mubr.f32.gmra.mrb[0].mxu0 %v520
      %v622 = vpop.f32.mrb[0].mxu0
      %v623 = vadd.f32 0.0, %v622
      %v624 = vpop.f32.mrb[0].mxu0
      %625 = vmatprep.mubr.f32.mxu0 0.0
      %626 = vmatmul.mubr.f32.gmra.mrb[0].mxu0 %v523
      %v627 = vpop.f32.mrb[0].mxu0
      %v628 = vadd.f32 0.0, %v627
      %v629 = vpop.f32.mrb[0].mxu0
      %630 = vmatprep.mubr.f32.mxu0 0.0
      %631 = vmatmul.mubr.f32.gmra.mrb[0].mxu0 %v526
      %v632 = vpop.f32.mrb[0].mxu0
      %v633 = vadd.f32 0.0, %v632
      %v634 = vpop.f32.mrb[0].mxu0
      %635 = vdwg.mxu0
      %v636 = vadd.f32 %v456, %v598
      %v637 = vadd.f32 %v461, %v603
      %v638 = vadd.f32 %v466, %v608
      %v639 = vadd.f32 %v471, %v613
      %v640 = vadd.f32 %v476, %v618
      %v641 = vadd.f32 %v481, %v623
      %v642 = vadd.f32 %v486, %v628
      %v643 = vadd.f32 %v491, %v633
      %s644 = scalar_lea.vmem %s197, 288
      %v645 = vld [vmem:[%s644] sm:$0xff]
      %v646 = vld [vmem:[%s644 + $0x10] sm:$0xff]
      %v647 = vld [vmem:[%s644 + $0x20] sm:$0xff]
      %v648 = vld [vmem:[%s644 + $0x30] sm:$0xff]
      %v649 = vld [vmem:[%s644 + $0x40] sm:$0xff]
      %v650 = vld [vmem:[%s644 + $0x50] sm:$0xff]
      %v651 = vld [vmem:[%s644 + $0x60] sm:$0xff]
      %v652 = vld [vmem:[%s644 + $0x70] sm:$0xff]
      %s653 = scalar_lea.vmem %s1, 12
      %v654 = vld [vmem:[%s653] sm:$0xf]
      %v656 = vsel %vm228, %v645, 0
      %v659 = vsel %vm228, %v646, 0
      %v662 = vsel %vm228, %v647, 0
      %v665 = vsel %vm228, %v648, 0
      %v668 = vsel %vm228, %v649, 0
      %v671 = vsel %vm228, %v650, 0
      %v674 = vsel %vm228, %v651, 0
      %v677 = vsel %vm228, %v652, 0
      %v680 = vsel %vm253, %v654, 0
      %682 = vmatprep.subr.mxu0 0.0
      %683 = vmatpush1.msra.mxu0 %v680
      %684 = vmatprep.subr.mxu0 0.0
      %685 = vmatpush1.msra.mxu0 0.0
      %686 = vmatprep.subr.mxu0 0.0
      %687 = vmatpush1.msra.mxu0 0.0
      %688 = vmatprep.subr.mxu0 0.0
      %689 = vmatpush1.msra.mxu0 0.0
      %690 = vmatprep.subr.mxu0 0.0
      %691 = vmatpush1.msra.mxu0 0.0
      %692 = vmatprep.subr.mxu0 0.0
      %693 = vmatpush1.msra.mxu0 0.0
      %694 = vmatprep.subr.mxu0 0.0
      %695 = vmatpush1.msra.mxu0 0.0
      %696 = vmatprep.subr.mxu0 0.0
      %697 = vmatpush1.msra.mxu0 0.0
      %698 = vmatprep.subr.mxu0 0.0
      %699 = vmatpush1.msra.mxu0 0.0
      %700 = vmatprep.subr.mxu0 0.0
      %701 = vmatpush1.msra.mxu0 0.0
      %702 = vmatprep.subr.mxu0 0.0
      %703 = vmatpush1.msra.mxu0 0.0
      %704 = vmatprep.subr.mxu0 0.0
      %705 = vmatpush1.msra.mxu0 0.0
      %706 = vmatprep.subr.mxu0 0.0
      %707 = vmatpush1.msra.mxu0 0.0
      %708 = vmatprep.subr.mxu0 0.0
      %709 = vmatpush1.msra.mxu0 0.0
      %710 = vmatprep.subr.mxu0 0.0
      %711 = vmatpush1.msra.mxu0 0.0
      %712 = vmatprep.subr.mxu0 0.0
      %713 = vmatpush1.msra.mxu0 0.0
      %714 = vmatprep.subr.mxu0 0.0
      %715 = vmatpush1.msra.mxu0 0.0
      %716 = vmatprep.subr.mxu0 0.0
      %717 = vmatpush1.msra.mxu0 0.0
      %718 = vmatprep.subr.mxu0 0.0
      %719 = vmatpush1.msra.mxu0 0.0
      %720 = vmatprep.subr.mxu0 0.0
      %721 = vmatpush1.msra.mxu0 0.0
      %722 = vmatprep.subr.mxu0 0.0
      %723 = vmatpush1.msra.mxu0 0.0
      %724 = vmatprep.subr.mxu0 0.0
      %725 = vmatpush1.msra.mxu0 0.0
      %726 = vmatprep.subr.mxu0 0.0
      %727 = vmatpush1.msra.mxu0 0.0
      %728 = vmatprep.subr.mxu0 0.0
      %729 = vmatpush1.msra.mxu0 0.0
      %730 = vmatprep.subr.mxu0 0.0
      %731 = vmatpush1.msra.mxu0 0.0
      %732 = vmatprep.subr.mxu0 0.0
      %733 = vmatpush1.msra.mxu0 0.0
      %734 = vmatprep.subr.mxu0 0.0
      %735 = vmatpush1.msra.mxu0 0.0
      %736 = vmatprep.subr.mxu0 0.0
      %737 = vmatpush1.msra.mxu0 0.0
      %738 = vmatprep.subr.mxu0 0.0
      %739 = vmatpush1.msra.mxu0 0.0
      %740 = vmatprep.subr.mxu0 0.0
      %741 = vmatpush1.msra.mxu0 0.0
      %742 = vmatprep.subr.mxu0 0.0
      %743 = vmatpush1.msra.mxu0 0.0
      %744 = vmatprep.subr.mxu0 0.0
      %745 = vmatpush1.msra.mxu0 0.0
      %746 = vmatprep.mubr.f32.mxu0 0.0
      %747 = vmatmul.mubr.f32.gmra.mrb[0].mxu0 %v656
      %v748 = vpop.f32.mrb[0].mxu0
      %v749 = vadd.f32 0.0, %v748
      %v750 = vpop.f32.mrb[0].mxu0
      %751 = vmatprep.mubr.f32.mxu0 0.0
      %752 = vmatmul.mubr.f32.gmra.mrb[0].mxu0 %v659
      %v753 = vpop.f32.mrb[0].mxu0
      %v754 = vadd.f32 0.0, %v753
      %v755 = vpop.f32.mrb[0].mxu0
      %756 = vmatprep.mubr.f32.mxu0 0.0
      %757 = vmatmul.mubr.f32.gmra.mrb[0].mxu0 %v662
      %v758 = vpop.f32.mrb[0].mxu0
      %v759 = vadd.f32 0.0, %v758
      %v760 = vpop.f32.mrb[0].mxu0
      %761 = vmatprep.mubr.f32.mxu0 0.0
      %762 = vmatmul.mubr.f32.gmra.mrb[0].mxu0 %v665
      %v763 = vpop.f32.mrb[0].mxu0
      %v764 = vadd.f32 0.0, %v763
      %v765 = vpop.f32.mrb[0].mxu0
      %766 = vmatprep.mubr.f32.mxu0 0.0
      %767 = vmatmul.mubr.f32.gmra.mrb[0].mxu0 %v668
      %v768 = vpop.f32.mrb[0].mxu0
      %v769 = vadd.f32 0.0, %v768
      %v770 = vpop.f32.mrb[0].mxu0
      %771 = vmatprep.mubr.f32.mxu0 0.0
      %772 = vmatmul.mubr.f32.gmra.mrb[0].mxu0 %v671
      %v773 = vpop.f32.mrb[0].mxu0
      %v774 = vadd.f32 0.0, %v773
      %v775 = vpop.f32.mrb[0].mxu0
      %776 = vmatprep.mubr.f32.mxu0 0.0
      %777 = vmatmul.mubr.f32.gmra.mrb[0].mxu0 %v674
      %v778 = vpop.f32.mrb[0].mxu0
      %v779 = vadd.f32 0.0, %v778
      %v780 = vpop.f32.mrb[0].mxu0
      %781 = vmatprep.mubr.f32.mxu0 0.0
      %782 = vmatmul.mubr.f32.gmra.mrb[0].mxu0 %v677
      %v783 = vpop.f32.mrb[0].mxu0
      %v784 = vadd.f32 0.0, %v783
      %v785 = vpop.f32.mrb[0].mxu0
      %786 = vdwg.mxu0
      %v787 = vadd.f32 %v636, %v749
      %v788 = vadd.f32 %v637, %v754
      %v789 = vadd.f32 %v638, %v759
      %v790 = vadd.f32 %v639, %v764
      %v791 = vadd.f32 %v640, %v769
      %v792 = vadd.f32 %v641, %v774
      %v793 = vadd.f32 %v642, %v779
      %v794 = vadd.f32 %v643, %v784
      %s795 = scalar_lea.vmem %s197, 432
      %v796 = vld [vmem:[%s795] sm:$0xff]
      %v797 = vld [vmem:[%s795 + $0x10] sm:$0xff]
      %v798 = vld [vmem:[%s795 + $0x20] sm:$0xff]
      %v799 = vld [vmem:[%s795 + $0x30] sm:$0xff]
      %v800 = vld [vmem:[%s795 + $0x40] sm:$0xff]
      %v801 = vld [vmem:[%s795 + $0x50] sm:$0xff]
      %v802 = vld [vmem:[%s795 + $0x60] sm:$0xff]
      %v803 = vld [vmem:[%s795 + $0x70] sm:$0xff]
      %s804 = scalar_lea.vmem %s1, 16
      %v805 = vld [vmem:[%s804] sm:$0xf]
      %v807 = vsel %vm228, %v796, 0
      %v810 = vsel %vm228, %v797, 0
      %v813 = vsel %vm228, %v798, 0
      %v816 = vsel %vm228, %v799, 0
      %v819 = vsel %vm228, %v800, 0
      %v822 = vsel %vm228, %v801, 0
      %v825 = vsel %vm228, %v802, 0
      %v828 = vsel %vm228, %v803, 0
      %v831 = vsel %vm253, %v805, 0
      %833 = vmatprep.subr.mxu0 0.0
      %834 = vmatpush1.msra.mxu0 %v831
      %835 = vmatprep.subr.mxu0 0.0
      %836 = vmatpush1.msra.mxu0 0.0
      %837 = vmatprep.subr.mxu0 0.0
      %838 = vmatpush1.msra.mxu0 0.0
      %839 = vmatprep.subr.mxu0 0.0
      %840 = vmatpush1.msra.mxu0 0.0
      %841 = vmatprep.subr.mxu0 0.0
      %842 = vmatpush1.msra.mxu0 0.0
      %843 = vmatprep.subr.mxu0 0.0
      %844 = vmatpush1.msra.mxu0 0.0
      %845 = vmatprep.subr.mxu0 0.0
      %846 = vmatpush1.msra.mxu0 0.0
      %847 = vmatprep.subr.mxu0 0.0
      %848 = vmatpush1.msra.mxu0 0.0
      %849 = vmatprep.subr.mxu0 0.0
      %850 = vmatpush1.msra.mxu0 0.0
      %851 = vmatprep.subr.mxu0 0.0
      %852 = vmatpush1.msra.mxu0 0.0
      %853 = vmatprep.subr.mxu0 0.0
      %854 = vmatpush1.msra.mxu0 0.0
      %855 = vmatprep.subr.mxu0 0.0
      %856 = vmatpush1.msra.mxu0 0.0
      %857 = vmatprep.subr.mxu0 0.0
      %858 = vmatpush1.msra.mxu0 0.0
      %859 = vmatprep.subr.mxu0 0.0
      %860 = vmatpush1.msra.mxu0 0.0
      %861 = vmatprep.subr.mxu0 0.0
      %862 = vmatpush1.msra.mxu0 0.0
      %863 = vmatprep.subr.mxu0 0.0
      %864 = vmatpush1.msra.mxu0 0.0
      %865 = vmatprep.subr.mxu0 0.0
      %866 = vmatpush1.msra.mxu0 0.0
      %867 = vmatprep.subr.mxu0 0.0
      %868 = vmatpush1.msra.mxu0 0.0
      %869 = vmatprep.subr.mxu0 0.0
      %870 = vmatpush1.msra.mxu0 0.0
      %871 = vmatprep.subr.mxu0 0.0
      %872 = vmatpush1.msra.mxu0 0.0
      %873 = vmatprep.subr.mxu0 0.0
      %874 = vmatpush1.msra.mxu0 0.0
      %875 = vmatprep.subr.mxu0 0.0
      %876 = vmatpush1.msra.mxu0 0.0
      %877 = vmatprep.subr.mxu0 0.0
      %878 = vmatpush1.msra.mxu0 0.0
      %879 = vmatprep.subr.mxu0 0.0
      %880 = vmatpush1.msra.mxu0 0.0
      %881 = vmatprep.subr.mxu0 0.0
      %882 = vmatpush1.msra.mxu0 0.0
      %883 = vmatprep.subr.mxu0 0.0
      %884 = vmatpush1.msra.mxu0 0.0
      %885 = vmatprep.subr.mxu0 0.0
      %886 = vmatpush1.msra.mxu0 0.0
      %887 = vmatprep.subr.mxu0 0.0
      %888 = vmatpush1.msra.mxu0 0.0
      %889 = vmatprep.subr.mxu0 0.0
      %890 = vmatpush1.msra.mxu0 0.0
      %891 = vmatprep.subr.mxu0 0.0
      %892 = vmatpush1.msra.mxu0 0.0
      %893 = vmatprep.subr.mxu0 0.0
      %894 = vmatpush1.msra.mxu0 0.0
      %895 = vmatprep.subr.mxu0 0.0
      %896 = vmatpush1.msra.mxu0 0.0
      %897 = vmatprep.mubr.f32.mxu0 0.0
      %898 = vmatmul.mubr.f32.gmra.mrb[0].mxu0 %v807
      %v899 = vpop.f32.mrb[0].mxu0
      %v900 = vadd.f32 0.0, %v899
      %v901 = vpop.f32.mrb[0].mxu0
      %902 = vmatprep.mubr.f32.mxu0 0.0
      %903 = vmatmul.mubr.f32.gmra.mrb[0].mxu0 %v810
      %v904 = vpop.f32.mrb[0].mxu0
      %v905 = vadd.f32 0.0, %v904
      %v906 = vpop.f32.mrb[0].mxu0
      %907 = vmatprep.mubr.f32.mxu0 0.0
      %908 = vmatmul.mubr.f32.gmra.mrb[0].mxu0 %v813
      %v909 = vpop.f32.mrb[0].mxu0
      %v910 = vadd.f32 0.0, %v909
      %v911 = vpop.f32.mrb[0].mxu0
      %912 = vmatprep.mubr.f32.mxu0 0.0
      %913 = vmatmul.mubr.f32.gmra.mrb[0].mxu0 %v816
      %v914 = vpop.f32.mrb[0].mxu0
      %v915 = vadd.f32 0.0, %v914
      %v916 = vpop.f32.mrb[0].mxu0
      %917 = vmatprep.mubr.f32.mxu0 0.0
      %918 = vmatmul.mubr.f32.gmra.mrb[0].mxu0 %v819
      %v919 = vpop.f32.mrb[0].mxu0
      %v920 = vadd.f32 0.0, %v919
      %v921 = vpop.f32.mrb[0].mxu0
      %922 = vmatprep.mubr.f32.mxu0 0.0
      %923 = vmatmul.mubr.f32.gmra.mrb[0].mxu0 %v822
      %v924 = vpop.f32.mrb[0].mxu0
      %v925 = vadd.f32 0.0, %v924
      %v926 = vpop.f32.mrb[0].mxu0
      %927 = vmatprep.mubr.f32.mxu0 0.0
      %928 = vmatmul.mubr.f32.gmra.mrb[0].mxu0 %v825
      %v929 = vpop.f32.mrb[0].mxu0
      %v930 = vadd.f32 0.0, %v929
      %v931 = vpop.f32.mrb[0].mxu0
      %932 = vmatprep.mubr.f32.mxu0 0.0
      %933 = vmatmul.mubr.f32.gmra.mrb[0].mxu0 %v828
      %v934 = vpop.f32.mrb[0].mxu0
      %v935 = vadd.f32 0.0, %v934
      %v936 = vpop.f32.mrb[0].mxu0
      %937 = vdwg.mxu0
      %v938 = vadd.f32 %v787, %v900
      %v939 = vadd.f32 %v788, %v905
      %v940 = vadd.f32 %v789, %v910
      %v941 = vadd.f32 %v790, %v915
      %v942 = vadd.f32 %v791, %v920
      %v943 = vadd.f32 %v792, %v925
      %v944 = vadd.f32 %v793, %v930
      %v945 = vadd.f32 %v794, %v935
      %v946 = vld [vmem:[%s644 + $0x1] sm:$0xff]
      %v947 = vld [vmem:[%s644 + $0x11] sm:$0xff]
      %v948 = vld [vmem:[%s644 + $0x21] sm:$0xff]
      %v949 = vld [vmem:[%s644 + $0x31] sm:$0xff]
      %v950 = vld [vmem:[%s644 + $0x41] sm:$0xff]
      %v951 = vld [vmem:[%s644 + $0x51] sm:$0xff]
      %v952 = vld [vmem:[%s644 + $0x61] sm:$0xff]
      %v953 = vld [vmem:[%s644 + $0x71] sm:$0xff]
      %s954 = scalar_lea.vmem %s1, 20
      %v955 = vld [vmem:[%s954] sm:$0xf]
      %v957 = vsel %vm228, %v946, 0
      %v960 = vsel %vm228, %v947, 0
      %v963 = vsel %vm228, %v948, 0
      %v966 = vsel %vm228, %v949, 0
      %v969 = vsel %vm228, %v950, 0
      %v972 = vsel %vm228, %v951, 0
      %v975 = vsel %vm228, %v952, 0
      %v978 = vsel %vm228, %v953, 0
      %v981 = vsel %vm253, %v955, 0
      %983 = vmatprep.subr.mxu0 0.0
      %984 = vmatpush1.msra.mxu0 %v981
      %985 = vmatprep.subr.mxu0 0.0
      %986 = vmatpush1.msra.mxu0 0.0
      %987 = vmatprep.subr.mxu0 0.0
      %988 = vmatpush1.msra.mxu0 0.0
      %989 = vmatprep.subr.mxu0 0.0
      %990 = vmatpush1.msra.mxu0 0.0
      %991 = vmatprep.subr.mxu0 0.0
      %992 = vmatpush1.msra.mxu0 0.0
      %993 = vmatprep.subr.mxu0 0.0
      %994 = vmatpush1.msra.mxu0 0.0
      %995 = vmatprep.subr.mxu0 0.0
      %996 = vmatpush1.msra.mxu0 0.0
      %997 = vmatprep.subr.mxu0 0.0
      %998 = vmatpush1.msra.mxu0 0.0
      %999 = vmatprep.subr.mxu0 0.0
      %1000 = vmatpush1.msra.mxu0 0.0
      %1001 = vmatprep.subr.mxu0 0.0
      %1002 = vmatpush1.msra.mxu0 0.0
      %1003 = vmatprep.subr.mxu0 0.0
      %1004 = vmatpush1.msra.mxu0 0.0
      %1005 = vmatprep.subr.mxu0 0.0
      %1006 = vmatpush1.msra.mxu0 0.0
      %1007 = vmatprep.subr.mxu0 0.0
      %1008 = vmatpush1.msra.mxu0 0.0
      %1009 = vmatprep.subr.mxu0 0.0
      %1010 = vmatpush1.msra.mxu0 0.0
      %1011 = vmatprep.subr.mxu0 0.0
      %1012 = vmatpush1.msra.mxu0 0.0
      %1013 = vmatprep.subr.mxu0 0.0
      %1014 = vmatpush1.msra.mxu0 0.0
      %1015 = vmatprep.subr.mxu0 0.0
      %1016 = vmatpush1.msra.mxu0 0.0
      %1017 = vmatprep.subr.mxu0 0.0
      %1018 = vmatpush1.msra.mxu0 0.0
      %1019 = vmatprep.subr.mxu0 0.0
      %1020 = vmatpush1.msra.mxu0 0.0
      %1021 = vmatprep.subr.mxu0 0.0
      %1022 = vmatpush1.msra.mxu0 0.0
      %1023 = vmatprep.subr.mxu0 0.0
      %1024 = vmatpush1.msra.mxu0 0.0
      %1025 = vmatprep.subr.mxu0 0.0
      %1026 = vmatpush1.msra.mxu0 0.0
      %1027 = vmatprep.subr.mxu0 0.0
      %1028 = vmatpush1.msra.mxu0 0.0
      %1029 = vmatprep.subr.mxu0 0.0
      %1030 = vmatpush1.msra.mxu0 0.0
      %1031 = vmatprep.subr.mxu0 0.0
      %1032 = vmatpush1.msra.mxu0 0.0
      %1033 = vmatprep.subr.mxu0 0.0
      %1034 = vmatpush1.msra.mxu0 0.0
      %1035 = vmatprep.subr.mxu0 0.0
      %1036 = vmatpush1.msra.mxu0 0.0
      %1037 = vmatprep.subr.mxu0 0.0
      %1038 = vmatpush1.msra.mxu0 0.0
      %1039 = vmatprep.subr.mxu0 0.0
      %1040 = vmatpush1.msra.mxu0 0.0
      %1041 = vmatprep.subr.mxu0 0.0
      %1042 = vmatpush1.msra.mxu0 0.0
      %1043 = vmatprep.subr.mxu0 0.0
      %1044 = vmatpush1.msra.mxu0 0.0
      %1045 = vmatprep.subr.mxu0 0.0
      %1046 = vmatpush1.msra.mxu0 0.0
      %1047 = vmatprep.mubr.f32.mxu0 0.0
      %1048 = vmatmul.mubr.f32.gmra.mrb[0].mxu0 %v957
      %v1049 = vpop.f32.mrb[0].mxu0
      %v1050 = vadd.f32 0.0, %v1049
      %v1051 = vpop.f32.mrb[0].mxu0
      %1052 = vmatprep.mubr.f32.mxu0 0.0
      %1053 = vmatmul.mubr.f32.gmra.mrb[0].mxu0 %v960
      %v1054 = vpop.f32.mrb[0].mxu0
      %v1055 = vadd.f32 0.0, %v1054
      %v1056 = vpop.f32.mrb[0].mxu0
      %1057 = vmatprep.mubr.f32.mxu0 0.0
      %1058 = vmatmul.mubr.f32.gmra.mrb[0].mxu0 %v963
      %v1059 = vpop.f32.mrb[0].mxu0
      %v1060 = vadd.f32 0.0, %v1059
      %v1061 = vpop.f32.mrb[0].mxu0
      %1062 = vmatprep.mubr.f32.mxu0 0.0
      %1063 = vmatmul.mubr.f32.gmra.mrb[0].mxu0 %v966
      %v1064 = vpop.f32.mrb[0].mxu0
      %v1065 = vadd.f32 0.0, %v1064
      %v1066 = vpop.f32.mrb[0].mxu0
      %1067 = vmatprep.mubr.f32.mxu0 0.0
      %1068 = vmatmul.mubr.f32.gmra.mrb[0].mxu0 %v969
      %v1069 = vpop.f32.mrb[0].mxu0
      %v1070 = vadd.f32 0.0, %v1069
      %v1071 = vpop.f32.mrb[0].mxu0
      %1072 = vmatprep.mubr.f32.mxu0 0.0
      %1073 = vmatmul.mubr.f32.gmra.mrb[0].mxu0 %v972
      %v1074 = vpop.f32.mrb[0].mxu0
      %v1075 = vadd.f32 0.0, %v1074
      %v1076 = vpop.f32.mrb[0].mxu0
      %1077 = vmatprep.mubr.f32.mxu0 0.0
      %1078 = vmatmul.mubr.f32.gmra.mrb[0].mxu0 %v975
      %v1079 = vpop.f32.mrb[0].mxu0
      %v1080 = vadd.f32 0.0, %v1079
      %v1081 = vpop.f32.mrb[0].mxu0
      %1082 = vmatprep.mubr.f32.mxu0 0.0
      %1083 = vmatmul.mubr.f32.gmra.mrb[0].mxu0 %v978
      %v1084 = vpop.f32.mrb[0].mxu0
      %v1085 = vadd.f32 0.0, %v1084
      %v1086 = vpop.f32.mrb[0].mxu0
      %1087 = vdwg.mxu0
      %v1088 = vadd.f32 %v938, %v1050
      %v1089 = vadd.f32 %v939, %v1055
      %v1090 = vadd.f32 %v940, %v1060
      %v1091 = vadd.f32 %v941, %v1065
      %v1092 = vadd.f32 %v942, %v1070
      %v1093 = vadd.f32 %v943, %v1075
      %v1094 = vadd.f32 %v944, %v1080
      %v1095 = vadd.f32 %v945, %v1085
      %s1096 = scalar_lea.vmem %s197, 16
      %v1097 = vld [vmem:[%s1096] sm:$0xff]
      %v1098 = vld [vmem:[%s1096 + $0x10] sm:$0xff]
      %v1099 = vld [vmem:[%s1096 + $0x20] sm:$0xff]
      %v1100 = vld [vmem:[%s1096 + $0x30] sm:$0xff]
      %v1101 = vld [vmem:[%s1096 + $0x40] sm:$0xff]
      %v1102 = vld [vmem:[%s1096 + $0x50] sm:$0xff]
      %v1103 = vld [vmem:[%s1096 + $0x60] sm:$0xff]
      %v1104 = vld [vmem:[%s1096 + $0x70] sm:$0xff]
      %s1105 = scalar_lea.vmem %s1, 24
      %v1106 = vld [vmem:[%s1105] sm:$0xf]
      %v1108 = vsel %vm228, %v1097, 0
      %v1111 = vsel %vm228, %v1098, 0
      %v1114 = vsel %vm228, %v1099, 0
      %v1117 = vsel %vm228, %v1100, 0
      %v1120 = vsel %vm228, %v1101, 0
      %v1123 = vsel %vm228, %v1102, 0
      %v1126 = vsel %vm228, %v1103, 0
      %v1129 = vsel %vm228, %v1104, 0
      %v1132 = vsel %vm253, %v1106, 0
      %1134 = vmatprep.subr.mxu0 0.0
      %1135 = vmatpush1.msra.mxu0 %v1132
      %1136 = vmatprep.subr.mxu0 0.0
      %1137 = vmatpush1.msra.mxu0 0.0
      %1138 = vmatprep.subr.mxu0 0.0
      %1139 = vmatpush1.msra.mxu0 0.0
      %1140 = vmatprep.subr.mxu0 0.0
      %1141 = vmatpush1.msra.mxu0 0.0
      %1142 = vmatprep.subr.mxu0 0.0
      %1143 = vmatpush1.msra.mxu0 0.0
      %1144 = vmatprep.subr.mxu0 0.0
      %1145 = vmatpush1.msra.mxu0 0.0
      %1146 = vmatprep.subr.mxu0 0.0
      %1147 = vmatpush1.msra.mxu0 0.0
      %1148 = vmatprep.subr.mxu0 0.0
      %1149 = vmatpush1.msra.mxu0 0.0
      %1150 = vmatprep.subr.mxu0 0.0
      %1151 = vmatpush1.msra.mxu0 0.0
      %1152 = vmatprep.subr.mxu0 0.0
      %1153 = vmatpush1.msra.mxu0 0.0
      %1154 = vmatprep.subr.mxu0 0.0
      %1155 = vmatpush1.msra.mxu0 0.0
      %1156 = vmatprep.subr.mxu0 0.0
      %1157 = vmatpush1.msra.mxu0 0.0
      %1158 = vmatprep.subr.mxu0 0.0
      %1159 = vmatpush1.msra.mxu0 0.0
      %1160 = vmatprep.subr.mxu0 0.0
      %1161 = vmatpush1.msra.mxu0 0.0
      %1162 = vmatprep.subr.mxu0 0.0
      %1163 = vmatpush1.msra.mxu0 0.0
      %1164 = vmatprep.subr.mxu0 0.0
      %1165 = vmatpush1.msra.mxu0 0.0
      %1166 = vmatprep.subr.mxu0 0.0
      %1167 = vmatpush1.msra.mxu0 0.0
      %1168 = vmatprep.subr.mxu0 0.0
      %1169 = vmatpush1.msra.mxu0 0.0
      %1170 = vmatprep.subr.mxu0 0.0
      %1171 = vmatpush1.msra.mxu0 0.0
      %1172 = vmatprep.subr.mxu0 0.0
      %1173 = vmatpush1.msra.mxu0 0.0
      %1174 = vmatprep.subr.mxu0 0.0
      %1175 = vmatpush1.msra.mxu0 0.0
      %1176 = vmatprep.subr.mxu0 0.0
      %1177 = vmatpush1.msra.mxu0 0.0
      %1178 = vmatprep.subr.mxu0 0.0
      %1179 = vmatpush1.msra.mxu0 0.0
      %1180 = vmatprep.subr.mxu0 0.0
      %1181 = vmatpush1.msra.mxu0 0.0
      %1182 = vmatprep.subr.mxu0 0.0
      %1183 = vmatpush1.msra.mxu0 0.0
      %1184 = vmatprep.subr.mxu0 0.0
      %1185 = vmatpush1.msra.mxu0 0.0
      %1186 = vmatprep.subr.mxu0 0.0
      %1187 = vmatpush1.msra.mxu0 0.0
      %1188 = vmatprep.subr.mxu0 0.0
      %1189 = vmatpush1.msra.mxu0 0.0
      %1190 = vmatprep.subr.mxu0 0.0
      %1191 = vmatpush1.msra.mxu0 0.0
      %1192 = vmatprep.subr.mxu0 0.0
      %1193 = vmatpush1.msra.mxu0 0.0
      %1194 = vmatprep.subr.mxu0 0.0
      %1195 = vmatpush1.msra.mxu0 0.0
      %1196 = vmatprep.subr.mxu0 0.0
      %1197 = vmatpush1.msra.mxu0 0.0
      %1198 = vmatprep.mubr.f32.mxu0 0.0
      %1199 = vmatmul.mubr.f32.gmra.mrb[0].mxu0 %v1108
      %v1200 = vpop.f32.mrb[0].mxu0
      %v1201 = vadd.f32 0.0, %v1200
      %v1202 = vpop.f32.mrb[0].mxu0
      %1203 = vmatprep.mubr.f32.mxu0 0.0
      %1204 = vmatmul.mubr.f32.gmra.mrb[0].mxu0 %v1111
      %v1205 = vpop.f32.mrb[0].mxu0
      %v1206 = vadd.f32 0.0, %v1205
      %v1207 = vpop.f32.mrb[0].mxu0
      %1208 = vmatprep.mubr.f32.mxu0 0.0
      %1209 = vmatmul.mubr.f32.gmra.mrb[0].mxu0 %v1114
      %v1210 = vpop.f32.mrb[0].mxu0
      %v1211 = vadd.f32 0.0, %v1210
      %v1212 = vpop.f32.mrb[0].mxu0
      %1213 = vmatprep.mubr.f32.mxu0 0.0
      %1214 = vmatmul.mubr.f32.gmra.mrb[0].mxu0 %v1117
      %v1215 = vpop.f32.mrb[0].mxu0
      %v1216 = vadd.f32 0.0, %v1215
      %v1217 = vpop.f32.mrb[0].mxu0
      %1218 = vmatprep.mubr.f32.mxu0 0.0
      %1219 = vmatmul.mubr.f32.gmra.mrb[0].mxu0 %v1120
      %v1220 = vpop.f32.mrb[0].mxu0
      %v1221 = vadd.f32 0.0, %v1220
      %v1222 = vpop.f32.mrb[0].mxu0
      %1223 = vmatprep.mubr.f32.mxu0 0.0
      %1224 = vmatmul.mubr.f32.gmra.mrb[0].mxu0 %v1123
      %v1225 = vpop.f32.mrb[0].mxu0
      %v1226 = vadd.f32 0.0, %v1225
      %v1227 = vpop.f32.mrb[0].mxu0
      %1228 = vmatprep.mubr.f32.mxu0 0.0
      %1229 = vmatmul.mubr.f32.gmra.mrb[0].mxu0 %v1126
      %v1230 = vpop.f32.mrb[0].mxu0
      %v1231 = vadd.f32 0.0, %v1230
      %v1232 = vpop.f32.mrb[0].mxu0
      %1233 = vmatprep.mubr.f32.mxu0 0.0
      %1234 = vmatmul.mubr.f32.gmra.mrb[0].mxu0 %v1129
      %v1235 = vpop.f32.mrb[0].mxu0
      %v1236 = vadd.f32 0.0, %v1235
      %v1237 = vpop.f32.mrb[0].mxu0
      %1238 = vdwg.mxu0
      %v1239 = vadd.f32 %v1088, %v1201
      %v1240 = vadd.f32 %v1089, %v1206
      %v1241 = vadd.f32 %v1090, %v1211
      %v1242 = vadd.f32 %v1091, %v1216
      %v1243 = vadd.f32 %v1092, %v1221
      %v1244 = vadd.f32 %v1093, %v1226
      %v1245 = vadd.f32 %v1094, %v1231
      %v1246 = vadd.f32 %v1095, %v1236
      %s1247 = scalar_lea.vmem %s197, 160
      %v1248 = vld [vmem:[%s1247] sm:$0xff]
      %v1249 = vld [vmem:[%s1247 + $0x10] sm:$0xff]
      %v1250 = vld [vmem:[%s1247 + $0x20] sm:$0xff]
      %v1251 = vld [vmem:[%s1247 + $0x30] sm:$0xff]
      %v1252 = vld [vmem:[%s1247 + $0x40] sm:$0xff]
      %v1253 = vld [vmem:[%s1247 + $0x50] sm:$0xff]
      %v1254 = vld [vmem:[%s1247 + $0x60] sm:$0xff]
      %v1255 = vld [vmem:[%s1247 + $0x70] sm:$0xff]
      %s1256 = scalar_lea.vmem %s1, 28
      %v1257 = vld [vmem:[%s1256] sm:$0xf]
      %v1259 = vsel %vm228, %v1248, 0
      %v1262 = vsel %vm228, %v1249, 0
      %v1265 = vsel %vm228, %v1250, 0
      %v1268 = vsel %vm228, %v1251, 0
      %v1271 = vsel %vm228, %v1252, 0
      %v1274 = vsel %vm228, %v1253, 0
      %v1277 = vsel %vm228, %v1254, 0
      %v1280 = vsel %vm228, %v1255, 0
      %v1283 = vsel %vm253, %v1257, 0
      %1285 = vmatprep.subr.mxu0 0.0
      %1286 = vmatpush1.msra.mxu0 %v1283
      %1287 = vmatprep.subr.mxu0 0.0
      %1288 = vmatpush1.msra.mxu0 0.0
      %1289 = vmatprep.subr.mxu0 0.0
      %1290 = vmatpush1.msra.mxu0 0.0
      %1291 = vmatprep.subr.mxu0 0.0
      %1292 = vmatpush1.msra.mxu0 0.0
      %1293 = vmatprep.subr.mxu0 0.0
      %1294 = vmatpush1.msra.mxu0 0.0
      %1295 = vmatprep.subr.mxu0 0.0
      %1296 = vmatpush1.msra.mxu0 0.0
      %1297 = vmatprep.subr.mxu0 0.0
      %1298 = vmatpush1.msra.mxu0 0.0
      %1299 = vmatprep.subr.mxu0 0.0
      %1300 = vmatpush1.msra.mxu0 0.0
      %1301 = vmatprep.subr.mxu0 0.0
      %1302 = vmatpush1.msra.mxu0 0.0
      %1303 = vmatprep.subr.mxu0 0.0
      %1304 = vmatpush1.msra.mxu0 0.0
      %1305 = vmatprep.subr.mxu0 0.0
      %1306 = vmatpush1.msra.mxu0 0.0
      %1307 = vmatprep.subr.mxu0 0.0
      %1308 = vmatpush1.msra.mxu0 0.0
      %1309 = vmatprep.subr.mxu0 0.0
      %1310 = vmatpush1.msra.mxu0 0.0
      %1311 = vmatprep.subr.mxu0 0.0
      %1312 = vmatpush1.msra.mxu0 0.0
      %1313 = vmatprep.subr.mxu0 0.0
      %1314 = vmatpush1.msra.mxu0 0.0
      %1315 = vmatprep.subr.mxu0 0.0
      %1316 = vmatpush1.msra.mxu0 0.0
      %1317 = vmatprep.subr.mxu0 0.0
      %1318 = vmatpush1.msra.mxu0 0.0
      %1319 = vmatprep.subr.mxu0 0.0
      %1320 = vmatpush1.msra.mxu0 0.0
      %1321 = vmatprep.subr.mxu0 0.0
      %1322 = vmatpush1.msra.mxu0 0.0
      %1323 = vmatprep.subr.mxu0 0.0
      %1324 = vmatpush1.msra.mxu0 0.0
      %1325 = vmatprep.subr.mxu0 0.0
      %1326 = vmatpush1.msra.mxu0 0.0
      %1327 = vmatprep.subr.mxu0 0.0
      %1328 = vmatpush1.msra.mxu0 0.0
      %1329 = vmatprep.subr.mxu0 0.0
      %1330 = vmatpush1.msra.mxu0 0.0
      %1331 = vmatprep.subr.mxu0 0.0
      %1332 = vmatpush1.msra.mxu0 0.0
      %1333 = vmatprep.subr.mxu0 0.0
      %1334 = vmatpush1.msra.mxu0 0.0
      %1335 = vmatprep.subr.mxu0 0.0
      %1336 = vmatpush1.msra.mxu0 0.0
      %1337 = vmatprep.subr.mxu0 0.0
      %1338 = vmatpush1.msra.mxu0 0.0
      %1339 = vmatprep.subr.mxu0 0.0
      %1340 = vmatpush1.msra.mxu0 0.0
      %1341 = vmatprep.subr.mxu0 0.0
      %1342 = vmatpush1.msra.mxu0 0.0
      %1343 = vmatprep.subr.mxu0 0.0
      %1344 = vmatpush1.msra.mxu0 0.0
      %1345 = vmatprep.subr.mxu0 0.0
      %1346 = vmatpush1.msra.mxu0 0.0
      %1347 = vmatprep.subr.mxu0 0.0
      %1348 = vmatpush1.msra.mxu0 0.0
      %1349 = vmatprep.mubr.f32.mxu0 0.0
      %1350 = vmatmul.mubr.f32.gmra.mrb[0].mxu0 %v1259
      %v1351 = vpop.f32.mrb[0].mxu0
      %v1352 = vadd.f32 0.0, %v1351
      %v1353 = vpop.f32.mrb[0].mxu0
      %1354 = vmatprep.mubr.f32.mxu0 0.0
      %1355 = vmatmul.mubr.f32.gmra.mrb[0].mxu0 %v1262
      %v1356 = vpop.f32.mrb[0].mxu0
      %v1357 = vadd.f32 0.0, %v1356
      %v1358 = vpop.f32.mrb[0].mxu0
      %1359 = vmatprep.mubr.f32.mxu0 0.0
      %1360 = vmatmul.mubr.f32.gmra.mrb[0].mxu0 %v1265
      %v1361 = vpop.f32.mrb[0].mxu0
      %v1362 = vadd.f32 0.0, %v1361
      %v1363 = vpop.f32.mrb[0].mxu0
      %1364 = vmatprep.mubr.f32.mxu0 0.0
      %1365 = vmatmul.mubr.f32.gmra.mrb[0].mxu0 %v1268
      %v1366 = vpop.f32.mrb[0].mxu0
      %v1367 = vadd.f32 0.0, %v1366
      %v1368 = vpop.f32.mrb[0].mxu0
      %1369 = vmatprep.mubr.f32.mxu0 0.0
      %1370 = vmatmul.mubr.f32.gmra.mrb[0].mxu0 %v1271
      %v1371 = vpop.f32.mrb[0].mxu0
      %v1372 = vadd.f32 0.0, %v1371
      %v1373 = vpop.f32.mrb[0].mxu0
      %1374 = vmatprep.mubr.f32.mxu0 0.0
      %1375 = vmatmul.mubr.f32.gmra.mrb[0].mxu0 %v1274
      %v1376 = vpop.f32.mrb[0].mxu0
      %v1377 = vadd.f32 0.0, %v1376
      %v1378 = vpop.f32.mrb[0].mxu0
      %1379 = vmatprep.mubr.f32.mxu0 0.0
      %1380 = vmatmul.mubr.f32.gmra.mrb[0].mxu0 %v1277
      %v1381 = vpop.f32.mrb[0].mxu0
      %v1382 = vadd.f32 0.0, %v1381
      %v1383 = vpop.f32.mrb[0].mxu0
      %1384 = vmatprep.mubr.f32.mxu0 0.0
      %1385 = vmatmul.mubr.f32.gmra.mrb[0].mxu0 %v1280
      %v1386 = vpop.f32.mrb[0].mxu0
      %v1387 = vadd.f32 0.0, %v1386
      %v1388 = vpop.f32.mrb[0].mxu0
      %1389 = vdwg.mxu0
      %v1390 = vadd.f32 %v1239, %v1352
      %v1391 = vadd.f32 %v1240, %v1357
      %v1392 = vadd.f32 %v1241, %v1362
      %v1393 = vadd.f32 %v1242, %v1367
      %v1394 = vadd.f32 %v1243, %v1372
      %v1395 = vadd.f32 %v1244, %v1377
      %v1396 = vadd.f32 %v1245, %v1382
      %v1397 = vadd.f32 %v1246, %v1387
      %v1398 = vld [vmem:[%s1096 + $0x1] sm:$0xff]
      %v1399 = vld [vmem:[%s1096 + $0x11] sm:$0xff]
      %v1400 = vld [vmem:[%s1096 + $0x21] sm:$0xff]
      %v1401 = vld [vmem:[%s1096 + $0x31] sm:$0xff]
      %v1402 = vld [vmem:[%s1096 + $0x41] sm:$0xff]
      %v1403 = vld [vmem:[%s1096 + $0x51] sm:$0xff]
      %v1404 = vld [vmem:[%s1096 + $0x61] sm:$0xff]
      %v1405 = vld [vmem:[%s1096 + $0x71] sm:$0xff]
      %s1406 = scalar_lea.vmem %s1, 32
      %v1407 = vld [vmem:[%s1406] sm:$0xf]
      %v1409 = vsel %vm228, %v1398, 0
      %v1412 = vsel %vm228, %v1399, 0
      %v1415 = vsel %vm228, %v1400, 0
      %v1418 = vsel %vm228, %v1401, 0
      %v1421 = vsel %vm228, %v1402, 0
      %v1424 = vsel %vm228, %v1403, 0
      %v1427 = vsel %vm228, %v1404, 0
      %v1430 = vsel %vm228, %v1405, 0
      %v1433 = vsel %vm253, %v1407, 0
      %1435 = vmatprep.subr.mxu0 0.0
      %1436 = vmatpush1.msra.mxu0 %v1433
      %1437 = vmatprep.subr.mxu0 0.0
      %1438 = vmatpush1.msra.mxu0 0.0
      %1439 = vmatprep.subr.mxu0 0.0
      %1440 = vmatpush1.msra.mxu0 0.0
      %1441 = vmatprep.subr.mxu0 0.0
      %1442 = vmatpush1.msra.mxu0 0.0
      %1443 = vmatprep.subr.mxu0 0.0
      %1444 = vmatpush1.msra.mxu0 0.0
      %1445 = vmatprep.subr.mxu0 0.0
      %1446 = vmatpush1.msra.mxu0 0.0
      %1447 = vmatprep.subr.mxu0 0.0
      %1448 = vmatpush1.msra.mxu0 0.0
      %1449 = vmatprep.subr.mxu0 0.0
      %1450 = vmatpush1.msra.mxu0 0.0
      %1451 = vmatprep.subr.mxu0 0.0
      %1452 = vmatpush1.msra.mxu0 0.0
      %1453 = vmatprep.subr.mxu0 0.0
      %1454 = vmatpush1.msra.mxu0 0.0
      %1455 = vmatprep.subr.mxu0 0.0
      %1456 = vmatpush1.msra.mxu0 0.0
      %1457 = vmatprep.subr.mxu0 0.0
      %1458 = vmatpush1.msra.mxu0 0.0
      %1459 = vmatprep.subr.mxu0 0.0
      %1460 = vmatpush1.msra.mxu0 0.0
      %1461 = vmatprep.subr.mxu0 0.0
      %1462 = vmatpush1.msra.mxu0 0.0
      %1463 = vmatprep.subr.mxu0 0.0
      %1464 = vmatpush1.msra.mxu0 0.0
      %1465 = vmatprep.subr.mxu0 0.0
      %1466 = vmatpush1.msra.mxu0 0.0
      %1467 = vmatprep.subr.mxu0 0.0
      %1468 = vmatpush1.msra.mxu0 0.0
      %1469 = vmatprep.subr.mxu0 0.0
      %1470 = vmatpush1.msra.mxu0 0.0
      %1471 = vmatprep.subr.mxu0 0.0
      %1472 = vmatpush1.msra.mxu0 0.0
      %1473 = vmatprep.subr.mxu0 0.0
      %1474 = vmatpush1.msra.mxu0 0.0
      %1475 = vmatprep.subr.mxu0 0.0
      %1476 = vmatpush1.msra.mxu0 0.0
      %1477 = vmatprep.subr.mxu0 0.0
      %1478 = vmatpush1.msra.mxu0 0.0
      %1479 = vmatprep.subr.mxu0 0.0
      %1480 = vmatpush1.msra.mxu0 0.0
      %1481 = vmatprep.subr.mxu0 0.0
      %1482 = vmatpush1.msra.mxu0 0.0
      %1483 = vmatprep.subr.mxu0 0.0
      %1484 = vmatpush1.msra.mxu0 0.0
      %1485 = vmatprep.subr.mxu0 0.0
      %1486 = vmatpush1.msra.mxu0 0.0
      %1487 = vmatprep.subr.mxu0 0.0
      %1488 = vmatpush1.msra.mxu0 0.0
      %1489 = vmatprep.subr.mxu0 0.0
      %1490 = vmatpush1.msra.mxu0 0.0
      %1491 = vmatprep.subr.mxu0 0.0
      %1492 = vmatpush1.msra.mxu0 0.0
      %1493 = vmatprep.subr.mxu0 0.0
      %1494 = vmatpush1.msra.mxu0 0.0
      %1495 = vmatprep.subr.mxu0 0.0
      %1496 = vmatpush1.msra.mxu0 0.0
      %1497 = vmatprep.subr.mxu0 0.0
      %1498 = vmatpush1.msra.mxu0 0.0
      %1499 = vmatprep.mubr.f32.mxu0 0.0
      %1500 = vmatmul.mubr.f32.gmra.mrb[0].mxu0 %v1409
      %v1501 = vpop.f32.mrb[0].mxu0
      %v1502 = vadd.f32 0.0, %v1501
      %v1503 = vpop.f32.mrb[0].mxu0
      %1504 = vmatprep.mubr.f32.mxu0 0.0
      %1505 = vmatmul.mubr.f32.gmra.mrb[0].mxu0 %v1412
      %v1506 = vpop.f32.mrb[0].mxu0
      %v1507 = vadd.f32 0.0, %v1506
      %v1508 = vpop.f32.mrb[0].mxu0
      %1509 = vmatprep.mubr.f32.mxu0 0.0
      %1510 = vmatmul.mubr.f32.gmra.mrb[0].mxu0 %v1415
      %v1511 = vpop.f32.mrb[0].mxu0
      %v1512 = vadd.f32 0.0, %v1511
      %v1513 = vpop.f32.mrb[0].mxu0
      %1514 = vmatprep.mubr.f32.mxu0 0.0
      %1515 = vmatmul.mubr.f32.gmra.mrb[0].mxu0 %v1418
      %v1516 = vpop.f32.mrb[0].mxu0
      %v1517 = vadd.f32 0.0, %v1516
      %v1518 = vpop.f32.mrb[0].mxu0
      %1519 = vmatprep.mubr.f32.mxu0 0.0
      %1520 = vmatmul.mubr.f32.gmra.mrb[0].mxu0 %v1421
      %v1521 = vpop.f32.mrb[0].mxu0
      %v1522 = vadd.f32 0.0, %v1521
      %v1523 = vpop.f32.mrb[0].mxu0
      %1524 = vmatprep.mubr.f32.mxu0 0.0
      %1525 = vmatmul.mubr.f32.gmra.mrb[0].mxu0 %v1424
      %v1526 = vpop.f32.mrb[0].mxu0
      %v1527 = vadd.f32 0.0, %v1526
      %v1528 = vpop.f32.mrb[0].mxu0
      %1529 = vmatprep.mubr.f32.mxu0 0.0
      %1530 = vmatmul.mubr.f32.gmra.mrb[0].mxu0 %v1427
      %v1531 = vpop.f32.mrb[0].mxu0
      %v1532 = vadd.f32 0.0, %v1531
      %v1533 = vpop.f32.mrb[0].mxu0
      %1534 = vmatprep.mubr.f32.mxu0 0.0
      %1535 = vmatmul.mubr.f32.gmra.mrb[0].mxu0 %v1430
      %v1536 = vpop.f32.mrb[0].mxu0
      %v1537 = vadd.f32 0.0, %v1536
      %v1538 = vpop.f32.mrb[0].mxu0
      %1539 = vdwg.mxu0
      %v1540 = vadd.f32 %v1390, %v1502
      %v1541 = vadd.f32 %v1391, %v1507
      %v1542 = vadd.f32 %v1392, %v1512
      %v1543 = vadd.f32 %v1393, %v1517
      %v1544 = vadd.f32 %v1394, %v1522
      %v1545 = vadd.f32 %v1395, %v1527
      %v1546 = vadd.f32 %v1396, %v1532
      %v1547 = vadd.f32 %v1397, %v1537
      %v1548 = vld [vmem:[%s2] sm:$0x1]
      %v1550 = vlaneseq
      %v1551 = vshrl.u32 %v1550, 7
      %v1552 = vsub.s32 0, %v1551
      %v1553 = vrot.slane %v1548, %v1552
      %v1555 = vadd.f32 %v1540, %v1553
      %v1556 = vadd.f32 %v1541, %v1553
      %v1557 = vadd.f32 %v1542, %v1553
      %v1558 = vadd.f32 %v1543, %v1553
      %v1559 = vadd.f32 %v1544, %v1553
      %v1560 = vadd.f32 %v1545, %v1553
      %v1561 = vadd.f32 %v1546, %v1553
      %v1562 = vadd.f32 %v1547, %v1553
      %1563 = vst [vmem:[%s206] sm:$0xff] %v1555
      %1564 = vst [vmem:[%s206 + $0x8] sm:$0xff] %v1556
      %1565 = vst [vmem:[%s206 + $0x10] sm:$0xff] %v1557
      %1566 = vst [vmem:[%s206 + $0x18] sm:$0xff] %v1558
      %1567 = vst [vmem:[%s206 + $0x20] sm:$0xff] %v1559
      %1568 = vst [vmem:[%s206 + $0x28] sm:$0xff] %v1560
      %1569 = vst [vmem:[%s206 + $0x30] sm:$0xff] %v1561
      %1570 = vst [vmem:[%s206 + $0x38] sm:$0xff] %v1562
      %s1571 = smul.u32 8, %s19
      %p1572 = scmp.lt.s32.totalorder %s18, 1
      %s1573 = scalar_select %p1572, %s18, 1
      %p1574 = scmp.lt.s32.totalorder %s1571, 7
      %s1575 = scalar_select %p1574, %s1571, 7
      %s1576 = smul.addr %s1573, 8
      %s1577 = sadd.s32 %s1575, %s1576
      %s1578 = smul.addr %s1577, 8
      %s1579 = scalar_lea.vmem %s3, %s1578
      // Predicated region
      $region33: #{downsample_conv.1} parent=31 // pred_check
        %p1580 = pneg %p116
      $region34: #{downsample_conv.1} parent=31 // pred_check_branch
        %1582 = sbr.rel (%p1580) target = $region36
      $region35: #{downsample_conv.1} parent=31 // pred_region
        %s1583 = smul.u32 8, %s19
      $region36: #{downsample_conv.1} parent=31 // pred_fallthru
        _
    $region32: #{downsample_conv.1} parent=5 // pred_fallthru
      _
    %p1584 = scmp.le.s32.totalorder 2, %s9
    // Predicated region
    $region37: #{downsample_conv.1} parent=5 // pred_check
      %p1585 = pneg %p1584
    $region38: #{downsample_conv.1} parent=5 // pred_check_branch
      %1587 = sbr.rel (%p1585) target = $region40
    $region39: #{downsample_conv.1} parent=5 // pred_region
      %s1588 = ssub.s32 %s9, 2
      // Predicated region
      $region41: #{downsample_conv.1} parent=39 // pred_check
        %p1589 = pneg %p122
      $region42: #{downsample_conv.1} parent=39 // pred_check_branch
        %1591 = sbr.rel (%p1589) target = $region44
      $region43: #{downsample_conv.1} parent=39 // pred_region
        %s1592 = smul.u32 8, %s21
        %p1593 = scmp.lt.s32.totalorder %s20, 1
        %s1594 = scalar_select %p1593, %s20, 1
        %p1595 = scmp.lt.s32.totalorder %s1592, 7
        %s1596 = scalar_select %p1595, %s1592, 7
        %s1597 = smul.addr %s1594, 8
        %s1598 = sadd.s32 %s1596, %s1597
        %s1599 = smul.addr %s1598, 8
        %s1600 = scalar_lea.vmem %s3, %s1599
      $region44: #{downsample_conv.1} parent=39 // pred_fallthru
        _
    $region40: #{downsample_conv.1} parent=5 // pred_fallthru
      _
  $region6: #{downsample_conv.1} parent=0 // loop_footer
    %s13 = sadd.s32 1, %s9
  $region7: #{downsample_conv.1} parent=0 // loop_footer_branch
    %8 = sbr.rel target = $region3
  $region8: #{downsample_conv.1} parent=0 // loop_exit
    _

</llo_original>
